<compile_context>
chip_gen: v7x
topology: tpu7x:2x2x1
jax: 0.10.0
libtpu: 0.0.40
codegen_flags: <defaults>
</compile_context>

<pallas_src>
import functools

import numpy as np
import jax
import jax.numpy as jnp
from jax.experimental import pallas as pl
from jax.experimental.pallas import tpu as pltpu


# =============================================================================
# Call 1: streaming qa-logits (nn.Linear(D, 2)) on the MXU
# =============================================================================
def _logits_kernel(bqa_ref, x_ref, w_ref, start_out, end_out):
    x = x_ref[0].astype(jnp.float32)                        # (TS, D) upcast in VMEM
    w = w_ref[...]                                          # (D, 128) f32
    qa = jnp.dot(x, w, preferred_element_type=jnp.float32,
                 precision=jax.lax.Precision.HIGHEST)       # (TS, 128) on the MXU
    qa_t = jnp.transpose(qa)                                # small XLU transpose
    start_out[0] = qa_t[0:1, :] + bqa_ref[0]                # (1, TS) lane-dense
    end_out[0] = qa_t[1:2, :] + bqa_ref[1]                  # (1, TS) lane-dense


# =============================================================================
# Call 2: per-batch epilogue (score_diff + CE(ignore_index) + BCE + loss)
# =============================================================================
def _epilogue_kernel(seq_len, ignore_index, n_batch,
                     ctx_ref, sp_ref, ep_ref, imp_ref, bint_ref,
                     sl_ref, el_ref, cls_ref, wint_ref,
                     score_ref, loss_ref, acc_ref):
    i = pl.program_id(0)
    neg_inf = jnp.float32(-jnp.inf)

    @pl.when(i == 0)
    def _init():
        acc_ref[0] = jnp.float32(0.0)   # start-CE sum
        acc_ref[1] = jnp.float32(0.0)   # start-CE count
        acc_ref[2] = jnp.float32(0.0)   # end-CE sum
        acc_ref[3] = jnp.float32(0.0)   # end-CE count
        acc_ref[4] = jnp.float32(0.0)   # BCE sum

    sl = sl_ref[0]                                          # (1, Sp) f32
    el = el_ref[0]                                          # (1, Sp) f32
    sp_len = sl.shape[-1]

    col1 = jax.lax.broadcasted_iota(jnp.int32, (1, sp_len), 1)
    in_seq = col1 < seq_len                                 # mask padded lanes

    # ---- score_diff (exact parity with torch's triu==0 -> -inf quirk) -------
    # TODO(synk): the `m != 0` quirk blocks an O(S) suffix-max rewrite; kept
    # the masked (S, S) max for exact parity (vectorized, per batch row).
    m = sl[0][:, None] + el[0][None, :]                     # (Sp, Sp)
    row_i = jax.lax.broadcasted_iota(jnp.int32, (sp_len, sp_len), 0)
    col_i = jax.lax.broadcasted_iota(jnp.int32, (sp_len, sp_len), 1)
    cs = ctx_ref[i]
    valid = ((row_i >= cs) & (col_i >= cs) & (col_i >= row_i)
             & (row_i < seq_len) & (col_i < seq_len) & (m != 0.0))
    score_has = jnp.max(jnp.where(valid, m, neg_inf))
    # score_null = start[0] + end[0]: single-element read (no full-lane reduce)
    score_null = jnp.sum(sl[0:1, 0:1] + el[0:1, 0:1])
    score_ref[i] = score_null - score_has

    # ---- CrossEntropy(ignore_index) contributions ---------------------------
    def ce_terms(logits_row, tgt):
        masked = jnp.where(in_seq, logits_row, neg_inf)
        mx = jnp.max(masked)
        lse = mx + jnp.log(jnp.sum(jnp.exp(masked - mx)))
        picked = jnp.sum(jnp.where(col1 == tgt, logits_row, 0.0))
        validf = jnp.where(tgt != ignore_index,
                           jnp.float32(1.0), jnp.float32(0.0))
        return validf * (lse - picked), validf

    ls, vs = ce_terms(sl, sp_ref[i])
    le, ve = ce_terms(el, ep_ref[i])
    acc_ref[0] = acc_ref[0] + ls
    acc_ref[1] = acc_ref[1] + vs
    acc_ref[2] = acc_ref[2] + le
    acc_ref[3] = acc_ref[3] + ve

    # ---- BCEWithLogits contribution (intensive = Linear(D, 1) on CLS) -------
    cls_row = cls_ref[0].astype(jnp.float32)                # (1, D)
    xw = jnp.sum(cls_row * wint_ref[...]) + bint_ref[0]
    y = imp_ref[i]
    acc_ref[4] = acc_ref[4] + (jnp.maximum(xw, 0.0) - xw * y
                               + jnp.log(1.0 + jnp.exp(-jnp.abs(xw))))

    # ---- finalize combined loss on the last grid step ------------------------
    @pl.when(i == n_batch - 1)
    def _final():
        qa_loss = 0.5 * (acc_ref[0] / acc_ref[1] + acc_ref[2] / acc_ref[3])
        bce = acc_ref[4] / n_batch
        loss_ref[0] = 0.5 * qa_loss + 0.5 * bce


# =============================================================================
# Wrapper
# =============================================================================
def _round_up(x, m):
    return ((x + m - 1) // m) * m


def _pick_seq_tile(s_pad):
    # Lane-dense tiles (multiple of 128); keep double-buffered tile a few MiB.
    if s_pad <= 512:
        return s_pad
    for ts in (512, 256, 128):
        if s_pad % ts == 0:
            return ts
    return 128


def intensive_forward(params, dropout_states, cls_hidden_state, context_starts,
                      start_positions, end_positions, is_impossibles,
                      ignore_index):
    wqa, bqa, wint, bint = params          # (2, D), (2,), (1, D), (1,)
    B, S, D = dropout_states.shape

    s_pad = _round_up(max(S, 128), 128)
    ts = _pick_seq_tile(s_pad)
    n_tiles = s_pad // ts

    # Stream x in its native dtype; pad seq axis so logits stores are
    # lane-dense multiples of 128.
    x = dropout_states
    if s_pad != S:
        x = jnp.pad(x, ((0, 0), (0, s_pad - S), (0, 0)))

    # Pack the two qa weight rows into a zero-padded (D, 128) slab for the MXU.
    wqa_f32 = wqa.astype(jnp.float32)
    w_packed = jnp.zeros((D, 128), jnp.float32)
    w_packed = w_packed.at[:, 0].set(wqa_f32[0]).at[:, 1].set(wqa_f32[1])

    smem = pl.BlockSpec(memory_space=pltpu.MemorySpace.SMEM)

    # ---------------- call 1: pipelined, megacore-parallel logits -------------
    start_pad, end_pad = pl.pallas_call(
        _logits_kernel,
        grid=(B, n_tiles),
        in_specs=[
            smem,                                               # bqa (2,)
            pl.BlockSpec((1, ts, D), lambda b, j: (b, j, 0)),   # x tile
            pl.BlockSpec((D, 128), lambda b, j: (0, 0)),        # packed weights
        ],
        out_specs=(
            pl.BlockSpec((1, 1, ts), lambda b, j: (b, 0, j)),
            pl.BlockSpec((1, 1, ts), lambda b, j: (b, 0, j)),
        ),
        out_shape=(
            jax.ShapeDtypeStruct((B, 1, s_pad), jnp.float32),   # start logits
            jax.ShapeDtypeStruct((B, 1, s_pad), jnp.float32),   # end logits
        ),
        compiler_params=pltpu.CompilerParams(
            dimension_semantics=("parallel", "parallel")),
    )(bqa.astype(jnp.float32), x, w_packed)

    # ---------------- call 2: tiny per-batch epilogue --------------------------
    epi = functools.partial(_epilogue_kernel, S, ignore_index, B)
    score_diff, total_loss = pl.pallas_call(
        epi,
        grid=(B,),
        in_specs=[
            smem,                                               # context_starts
            smem,                                               # start_positions
            smem,                                               # end_positions
            smem,                                               # is_impossibles
            smem,                                               # bint
            pl.BlockSpec((1, 1, s_pad), lambda i: (i, 0, 0)),   # start logits row
            pl.BlockSpec((1, 1, s_pad), lambda i: (i, 0, 0)),   # end logits row
            pl.BlockSpec((1, 1, D), lambda i: (i, 0, 0)),       # cls row
            pl.BlockSpec((1, D), lambda i: (0, 0)),             # w_int
        ],
        out_specs=(smem, smem),
        out_shape=(
            jax.ShapeDtypeStruct((B,), jnp.float32),            # score_diff
            jax.ShapeDtypeStruct((1,), jnp.float32),            # total_loss
        ),
        scratch_shapes=[pltpu.SMEM((8,), jnp.float32)],
        compiler_params=pltpu.CompilerParams(
            dimension_semantics=("arbitrary",)),
    )(
        context_starts.astype(jnp.int32),
        start_positions.astype(jnp.int32),
        end_positions.astype(jnp.int32),
        is_impossibles.astype(jnp.float32),
        bint.astype(jnp.float32),
        start_pad,
        end_pad,
        cls_hidden_state.reshape(B, 1, D),
        wint.astype(jnp.float32),
    )

    start_logits = start_pad.reshape(B, s_pad)[:, :S]
    end_logits = end_pad.reshape(B, s_pad)[:, :S]
    # ModelOutput(scores, start_logits, end_logits, loss)
    return score_diff, start_logits, end_logits, total_loss[0]


if __name__ == "__main__":
    B, S, D = 2, 16, 32
    ignore_index = -100

    key = jax.random.PRNGKey(0)
    ks = jax.random.split(key, 6)
    wqa = jax.random.normal(ks[0], (2, D), jnp.float32) * 0.1
    bqa = jax.random.normal(ks[1], (2,), jnp.float32) * 0.1
    wint = jax.random.normal(ks[2], (1, D), jnp.float32) * 0.1
    bint = jax.random.normal(ks[3], (1,), jnp.float32) * 0.1

    dropout_states = jax.random.normal(ks[4], (B, S, D), jnp.float32)
    cls_hidden_state = jax.random.normal(ks[5], (B, D), jnp.float32)
    context_starts = jnp.array([3, 0], jnp.int32)
    start_positions = jnp.array([5, ignore_index], jnp.int32)
    end_positions = jnp.array([7, 2], jnp.int32)
    is_impossibles = jnp.array([0.0, 1.0], jnp.float32)

    score_diff, start_l, end_l, loss = intensive_forward(
        (wqa, bqa, wint, bint), dropout_states, cls_hidden_state,
        context_starts, start_positions, end_positions, is_impossibles,
        ignore_index)
    jax.block_until_ready((score_diff, start_l, end_l, loss))

    # ---- numpy reference (mirrors the PyTorch forward exactly) -------------
    xn = np.asarray(dropout_states)
    clsn = np.asarray(cls_hidden_state)
    wqan, bqan = np.asarray(wqa), np.asarray(bqa)
    wintn, bintn = np.asarray(wint), np.asarray(bint)

    qa = xn @ wqan.T + bqan                      # (B, S, 2)
    s_ref, e_ref = qa[..., 0], qa[..., 1]
    inten = clsn @ wintn.T + bintn               # (B, 1)

    score_has = np.zeros(B, np.float32)
    for i in range(B):
        cs = int(context_starts[i])
        m = s_ref[i, cs:][:, None] + e_ref[i, cs:][None, :]
        tri = np.triu(m)
        tri[tri == 0] = -np.inf
        score_has[i] = tri.max()
    score_diff_ref = (s_ref[:, 0] + e_ref[:, 0]) - score_has

    def ce(logits, tgt):
        tot, cnt = 0.0, 0
        for i in range(B):
            if int(tgt[i]) == ignore_index:
                continue
            r = logits[i]
            mx = r.max()
            lse = mx + np.log(np.exp(r - mx).sum())
            tot += lse - r[int(tgt[i])]
            cnt += 1
        return tot / cnt

    qa_loss_ref = (ce(s_ref, np.asarray(start_positions))
                   + ce(e_ref, np.asarray(end_positions))) / 2.0
    xi = inten[:, 0]
    yv = np.asarray(is_impossibles, np.float32)
    bce_ref = np.mean(np.maximum(xi, 0.0) - xi * yv
                      + np.log1p(np.exp(-np.abs(xi))))
    loss_ref = 0.5 * qa_loss_ref + 0.5 * bce_ref

    np.testing.assert_allclose(np.asarray(score_diff), score_diff_ref,
                               rtol=1e-3, atol=1e-3)
    np.testing.assert_allclose(np.asarray(start_l), s_ref, rtol=1e-3, atol=1e-3)
    np.testing.assert_allclose(np.asarray(end_l), e_ref, rtol=1e-3, atol=1e-3)
    np.testing.assert_allclose(float(loss), loss_ref, rtol=1e-3, atol=1e-3)

    print("KERNEL_OK")
</pallas_src>

<mosaic_0001>
module attributes {stable_mosaic.version = 11 : i64} {
  func.func @_logits_kernel(%arg0: i32, %arg1: i32, %arg2: memref<2xf32, #tpu.memory_space<smem>>, %arg3: memref<1x128x32xf32, #tpu.memory_space<vmem>>, %arg4: memref<32x128xf32, #tpu.memory_space<vmem>>, %arg5: memref<1x1x128xf32, #tpu.memory_space<vmem>>, %arg6: memref<1x1x128xf32, #tpu.memory_space<vmem>>) attributes {dimension_semantics = [#tpu.dimension_semantics<parallel>, #tpu.dimension_semantics<parallel>], iteration_bounds = array<i64: 2, 1>, scalar_prefetch = 0 : i64, scratch_operands = 0 : i64, tpu.core_type = #tpu.core_type<tc>, window_params = [{transform_indices = @transform_0, window_bounds = array<i64: 2>}, {transform_indices = @transform_1, window_bounds = array<i64: 1, 128, 32>}, {pipeline_mode = #tpu.pipeline_mode<synchronous>, transform_indices = @transform_2, window_bounds = array<i64: 32, 128>}, {transform_indices = @transform_3, window_bounds = array<i64: 1, 1, 128>}, {transform_indices = @transform_4, window_bounds = array<i64: 1, 1, 128>}]} {
    %c0 = arith.constant 0 : index
    %c0_0 = arith.constant 0 : index
    %c0_1 = arith.constant 0 : index
    %0 = vector.load %arg3[%c0, %c0_0, %c0_1] : memref<1x128x32xf32, #tpu.memory_space<vmem>>, vector<1x128x32xf32>
    %1 = vector.shape_cast %0 : vector<1x128x32xf32> to vector<128x32xf32>
    %c0_2 = arith.constant 0 : index
    %c0_3 = arith.constant 0 : index
    %2 = vector.load %arg4[%c0_2, %c0_3] : memref<32x128xf32, #tpu.memory_space<vmem>>, vector<32x128xf32>
    %cst = arith.constant dense<0.000000e+00> : vector<128x128xf32>
    %3 = tpu.matmul %1, %2, %cst {dimension_numbers = #tpu.dot_dimension_numbers<[1], [0], [0], [1], [0, 0, 1, 1], [], []>, precision = #tpu.contract_precision<fp32>} : vector<128x32xf32>, vector<32x128xf32>, vector<128x128xf32> -> vector<128x128xf32>
    %4 = tpu.transpose %3, [1, 0] : vector<128x128xf32> -> vector<128x128xf32>
    %5 = vector.extract_strided_slice %4 {offsets = [0, 0], sizes = [1, 128], strides = [1, 1]} : vector<128x128xf32> to vector<1x128xf32>
    %c0_4 = arith.constant 0 : index
    %6 = memref.load %arg2[%c0_4] : memref<2xf32, #tpu.memory_space<smem>>
    %7 = vector.broadcast %6 : f32 to vector<1x128xf32>
    %8 = arith.addf %5, %7 : vector<1x128xf32>
    %c0_5 = arith.constant 0 : index
    %c0_6 = arith.constant 0 : index
    %c0_7 = arith.constant 0 : index
    %9 = vector.load %arg5[%c0_5, %c0_6, %c0_7] : memref<1x1x128xf32, #tpu.memory_space<vmem>>, vector<1x1x128xf32>
    %10 = vector.shape_cast %9 : vector<1x1x128xf32> to vector<1x128xf32>
    %11 = vector.shape_cast %8 : vector<1x128xf32> to vector<1x1x128xf32>
    tpu.vector_store %arg5[%c0_5, %c0_6, %c0_7], %11 {strides = array<i32>} : memref<1x1x128xf32, #tpu.memory_space<vmem>>, vector<1x1x128xf32>,
    %12 = vector.extract_strided_slice %4 {offsets = [1, 0], sizes = [1, 128], strides = [1, 1]} : vector<128x128xf32> to vector<1x128xf32>
    %c1 = arith.constant 1 : index
    %13 = memref.load %arg2[%c1] : memref<2xf32, #tpu.memory_space<smem>>
    %14 = vector.broadcast %13 : f32 to vector<1x128xf32>
    %15 = arith.addf %12, %14 : vector<1x128xf32>
    %c0_8 = arith.constant 0 : index
    %c0_9 = arith.constant 0 : index
    %c0_10 = arith.constant 0 : index
    %16 = vector.load %arg6[%c0_8, %c0_9, %c0_10] : memref<1x1x128xf32, #tpu.memory_space<vmem>>, vector<1x1x128xf32>
    %17 = vector.shape_cast %16 : vector<1x1x128xf32> to vector<1x128xf32>
    %18 = vector.shape_cast %15 : vector<1x128xf32> to vector<1x1x128xf32>
    tpu.vector_store %arg6[%c0_8, %c0_9, %c0_10], %18 {strides = array<i32>} : memref<1x1x128xf32, #tpu.memory_space<vmem>>, vector<1x1x128xf32>,
    return
  }
  func.func @transform_0(%arg0: i32, %arg1: i32) -> i32 {
    %c0_i32 = arith.constant 0 : i32
    %c0_i32_0 = arith.constant 0 : i32
    return %c0_i32 : i32
  }
  func.func @transform_1(%arg0: i32, %arg1: i32) -> (i32, i32, i32) {
    %c0_i32 = arith.constant 0 : i32
    %c0_i32_0 = arith.constant 0 : i32
    return %arg0, %arg1, %c0_i32 : i32, i32, i32
  }
  func.func @transform_2(%arg0: i32, %arg1: i32) -> (i32, i32) {
    %c0_i32 = arith.constant 0 : i32
    %c0_i32_0 = arith.constant 0 : i32
    %c0_i32_1 = arith.constant 0 : i32
    return %c0_i32, %c0_i32_0 : i32, i32
  }
  func.func @transform_3(%arg0: i32, %arg1: i32) -> (i32, i32, i32) {
    %c0_i32 = arith.constant 0 : i32
    %c0_i32_0 = arith.constant 0 : i32
    return %arg0, %c0_i32, %arg1 : i32, i32, i32
  }
  func.func @transform_4(%arg0: i32, %arg1: i32) -> (i32, i32, i32) {
    %c0_i32 = arith.constant 0 : i32
    %c0_i32_0 = arith.constant 0 : i32
    return %arg0, %c0_i32, %arg1 : i32, i32, i32
  }
}

</mosaic_0001>

<llo_original>
// kernel: tpu_custom_call.1
$region0: #{tpu_custom_call.1}
  #allocation0 [shape = 'u32[]', space=smem, size = 0x4, offset = 0x4, fixed_abs, tag = 'smem constant byte address 0x4 - core index']
  #allocation1 [shape = 'u32[144,128]{1,0:T(1,128)}', space=vmem, size = 0x12000, scoped, tag = 'internal scratch']
  %s0 = inlined_call_operand.vmem [shape: f32[2], index: 0, kind: input, shape index: {}]
  %s1 = inlined_call_operand.vmem [shape: f32[2,128,32], index: 1, kind: input, shape index: {}]
  %s2 = inlined_call_operand.vmem [shape: f32[32,128], index: 2, kind: input, shape index: {}]
  %s3 = inlined_call_operand.hbm [shape: f32[2,1,128], index: 3, kind: output, shape index: {0}]
  %s4 = inlined_call_operand.hbm [shape: f32[2,1,128], index: 4, kind: output, shape index: {1}]
  %5 = xla_tuple %s3, %s4
  %s6 = sld [smem:[#allocation0]]
  $region57: #{tpu_custom_call.1} parent=0
    _
  %s8 = ssub.s32 1, %s6
  %s9 = scalar_select 0, %s8, %s6
  $region1: #{tpu_custom_call.1} parent=0
    #allocation2 [shape = 'u8[512]{0}', space=smem, size = 0x200, scoped, tag = 'input window, operand 0, single buffered']
    #allocation3 [shape = 's32[2]{0}', space=sflag, size = 0x8, scoped, tag = 'scoped memory for tpu_custom_call.1']
    #allocation4 [shape = 's32[2]{0}', space=sflag, size = 0x8, scoped, tag = 'scoped memory for tpu_custom_call.1']
    #allocation5 [shape = 'u8[1024]{0}', space=vmem, size = 0x400, scoped, tag = 'output window, operand 0']
    #allocation6 [shape = 'u8[1024]{0}', space=vmem, size = 0x400, scoped, tag = 'output window, operand 1']
    #allocation7 [shape = 's32[2]{0}', space=sflag, size = 0x8, scoped, tag = 'scoped memory for tpu_custom_call.1']
    %10 = vsyncpa [#allocation4], 0
    %11 = vsyncpa [#allocation3], 0
    %s12 = scalar_lea.sflag [#allocation3], 1
    %13 = vsyncpa %s12, 0
    %14 = vsyncpa [#allocation7], 0
    %s15 = scalar_lea.sflag [#allocation7], 1
    %16 = vsyncpa %s15, 0
    loop: start=0, step=1, limit=4
    $region2: #{tpu_custom_call.1} parent=1 // loop_pre_header
      _
    $region3: #{tpu_custom_call.1} parent=1 // loop_header
      %s18 = sphi 0, %s22
      %p19 = scmp.ge.s32.totalorder %s18, 4
      %s25 = sphi 0, %s37
      %s26 = sphi 0, %s33
      %s27 = sphi 0, %s25
      %s28 = sphi 0, %s26
      %s29 = sphi 0, %s27
      %s30 = sphi 0, %s28
      %s38 = sphi 0, %s38
      %s40 = sphi 0, %s38
      %s41 = sphi 0, %s40
      %s55 = sphi 0, %s41
      %s63 = sphi 0, %s65
      %s66 = sphi 0, %s63
      %s67 = sphi 0, %s66
      %s83 = sphi 0, %s67
      %s87 = sphi 0, %s87
      %s89 = sphi 0, %s87
      %s90 = sphi 0, %s89
      %s104 = sphi 0, %s90
      %s112 = sphi 0, %s114
      %s115 = sphi 0, %s112
      %s116 = sphi 0, %s115
      %s132 = sphi 0, %s116
      %s140 = sphi 0, %s142
      %s143 = sphi 0, %s140
      %s144 = sphi 0, %s143
      %s160 = sphi 0, %s144
    $region4: #{tpu_custom_call.1} parent=1 // loop_header_branch
      %21 = sbr.rel (%p19) target = $region8
    $region5: #{tpu_custom_call.1} parent=1 // loop_body
      %s23 = ssub.s32 %s18, 1
      %s24 = ssub.s32 %s18, 2
      %s31 = sadd.s32 1, %s26
      %p32 = scmp.ge.s32.totalorder %s31, 1
      %s33 = scalar_select %p32, 0, %s31
      %s34 = sadd.s32 1, %s25
      %s35 = scalar_select %p32, %s34, %s25
      %p36 = scmp.ge.s32.totalorder %s35, 2
      %s37 = scalar_select %p36, 0, %s35
      %s39 = sadd.s32 %s38, 1
      %p42 = scmp.eq.s32.totalorder %s18, 1
      %p43 = scmp.ne.s32.totalorder %s38, %s40
      %p44 = scmp.eq.s32.totalorder %s18, 0
      %p45 = por %p43, %p44
      %p46 = scmp.ne.s32.totalorder %s38, %s40
      %p47 = scmp.eq.s32.totalorder %s23, 1
      %p48 = por %p46, %p47
      %p49 = scmp.ne.s32.totalorder %s40, %s41
      %p50 = scmp.eq.s32.totalorder %s23, 0
      %p51 = por %p49, %p50
      %p52 = scmp.ne.s32.totalorder %s40, %s41
      %p53 = scmp.eq.s32.totalorder %s24, 1
      %p54 = por %p52, %p53
      %p56 = scmp.ne.s32.totalorder %s41, %s55
      %p57 = scmp.eq.s32.totalorder %s24, 0
      %p58 = por %p56, %p57
      %s59 = ssub.s32 %s25, %s37
      %s60 = ssub.s32 %s26, %s33
      %s61 = sor.u32 %s59, %s60
      %p62 = scmp.eq.s32.totalorder %s61, 0
      %s64 = sadd.s32 %s63, 1
      %s65 = scalar_select %p62, %s63, %s64
      %p68 = pneg %p62
      %p69 = scmp.eq.s32.totalorder %s18, 1
      %p70 = por %p68, %p69
      %p71 = scmp.ne.s32.totalorder %s63, %s66
      %p72 = scmp.eq.s32.totalorder %s18, 0
      %p73 = por %p71, %p72
      %p74 = scmp.ne.s32.totalorder %s63, %s66
      %p75 = scmp.eq.s32.totalorder %s23, 1
      %p76 = por %p74, %p75
      %p77 = scmp.ne.s32.totalorder %s66, %s67
      %p78 = scmp.eq.s32.totalorder %s23, 0
      %p79 = por %p77, %p78
      %p80 = scmp.ne.s32.totalorder %s66, %s67
      %p81 = scmp.eq.s32.totalorder %s24, 1
      %p82 = por %p80, %p81
      %p84 = scmp.ne.s32.totalorder %s67, %s83
      %p85 = scmp.eq.s32.totalorder %s24, 0
      %p86 = por %p84, %p85
      %s88 = sadd.s32 %s87, 1
      %p91 = scmp.eq.s32.totalorder %s18, 1
      %p92 = scmp.ne.s32.totalorder %s87, %s89
      %p93 = scmp.eq.s32.totalorder %s18, 0
      %p94 = por %p92, %p93
      %p95 = scmp.ne.s32.totalorder %s87, %s89
      %p96 = scmp.eq.s32.totalorder %s23, 1
      %p97 = por %p95, %p96
      %p98 = scmp.ne.s32.totalorder %s89, %s90
      %p99 = scmp.eq.s32.totalorder %s23, 0
      %p100 = por %p98, %p99
      %p101 = scmp.ne.s32.totalorder %s89, %s90
      %p102 = scmp.eq.s32.totalorder %s24, 1
      %p103 = por %p101, %p102
      %p105 = scmp.ne.s32.totalorder %s90, %s104
      %p106 = scmp.eq.s32.totalorder %s24, 0
      %p107 = por %p105, %p106
      %s108 = ssub.s32 %s25, %s37
      %s109 = ssub.s32 %s26, %s33
      %s110 = sor.u32 %s108, %s109
      %p111 = scmp.eq.s32.totalorder %s110, 0
      %s113 = sadd.s32 %s112, 1
      %s114 = scalar_select %p111, %s112, %s113
      %p117 = pneg %p111
      %p118 = scmp.eq.s32.totalorder %s18, 1
      %p119 = por %p117, %p118
      %p120 = scmp.ne.s32.totalorder %s112, %s115
      %p121 = scmp.eq.s32.totalorder %s18, 0
      %p122 = por %p120, %p121
      %p123 = scmp.ne.s32.totalorder %s112, %s115
      %p124 = scmp.eq.s32.totalorder %s23, 1
      %p125 = por %p123, %p124
      %p126 = scmp.ne.s32.totalorder %s115, %s116
      %p127 = scmp.eq.s32.totalorder %s23, 0
      %p128 = por %p126, %p127
      %p129 = scmp.ne.s32.totalorder %s115, %s116
      %p130 = scmp.eq.s32.totalorder %s24, 1
      %p131 = por %p129, %p130
      %p133 = scmp.ne.s32.totalorder %s116, %s132
      %p134 = scmp.eq.s32.totalorder %s24, 0
      %p135 = por %p133, %p134
      %s136 = ssub.s32 %s25, %s37
      %s137 = ssub.s32 %s26, %s33
      %s138 = sor.u32 %s136, %s137
      %p139 = scmp.eq.s32.totalorder %s138, 0
      %s141 = sadd.s32 %s140, 1
      %s142 = scalar_select %p139, %s140, %s141
      %p145 = pneg %p139
      %p146 = scmp.eq.s32.totalorder %s18, 1
      %p147 = por %p145, %p146
      %p148 = scmp.ne.s32.totalorder %s140, %s143
      %p149 = scmp.eq.s32.totalorder %s18, 0
      %p150 = por %p148, %p149
      %p151 = scmp.ne.s32.totalorder %s140, %s143
      %p152 = scmp.eq.s32.totalorder %s23, 1
      %p153 = por %p151, %p152
      %p154 = scmp.ne.s32.totalorder %s143, %s144
      %p155 = scmp.eq.s32.totalorder %s23, 0
      %p156 = por %p154, %p155
      %p157 = scmp.ne.s32.totalorder %s143, %s144
      %p158 = scmp.eq.s32.totalorder %s24, 1
      %p159 = por %p157, %p158
      %p161 = scmp.ne.s32.totalorder %s144, %s160
      %p162 = scmp.eq.s32.totalorder %s24, 0
      %p163 = por %p161, %p162
      %p164 = scmp.le.s32.totalorder 1, %s18
      %p165 = scmp.lt.s32.totalorder %s18, 3
      %p166 = pnand %p164, %p165
      %p167 = pneg %p166
      // Predicated region
      $region9: #{tpu_custom_call.1} parent=5 // pred_check
        _
      $region10: #{tpu_custom_call.1} parent=5 // pred_check_branch
        %169 = sbr.rel (%p166) target = $region12
      $region11: #{tpu_custom_call.1} parent=5 // pred_region
        %s170 = ssub.s32 %s18, 1
        // Predicated region
        $region13: #{tpu_custom_call.1} parent=11 // pred_check
          %p171 = pneg %p51
        $region14: #{tpu_custom_call.1} parent=11 // pred_check_branch
          %173 = sbr.rel (%p171) target = $region16
        $region15: #{tpu_custom_call.1} parent=11 // pred_region
          %s175 = ssub.s32 16, 16
          %176 = vsyncadd [#allocation4], %s175
          %s178 = sshll.u32 %s0, 4
          %s179 = int_to_ptr.vmem [resolvable:$true] %s178
          %181 = dma.vmem_to_smem %s179, 16, [#allocation2], [#allocation4]
        $region16: #{tpu_custom_call.1} parent=11 // pred_fallthru
          _
        // Predicated region
        $region17: #{tpu_custom_call.1} parent=11 // pred_check
          %p182 = pneg %p100
        $region18: #{tpu_custom_call.1} parent=11 // pred_check_branch
          %184 = sbr.rel (%p182) target = $region20
        $region19: #{tpu_custom_call.1} parent=11 // pred_region
          _
        $region20: #{tpu_custom_call.1} parent=11 // pred_fallthru
          _
      $region12: #{tpu_custom_call.1} parent=5 // pred_fallthru
        _
      %p185 = scmp.lt.s32.totalorder %s18, 2
      // Predicated region
      $region21: #{tpu_custom_call.1} parent=5 // pred_check
        %p186 = pneg %p185
      $region22: #{tpu_custom_call.1} parent=5 // pred_check_branch
        %188 = sbr.rel (%p186) target = $region24
      $region23: #{tpu_custom_call.1} parent=5 // pred_region
        // Predicated region
        $region25: #{tpu_custom_call.1} parent=23 // pred_check
          %p189 = pneg %p73
        $region26: #{tpu_custom_call.1} parent=23 // pred_check_branch
          %191 = sbr.rel (%p189) target = $region28
        $region27: #{tpu_custom_call.1} parent=23 // pred_region
          %s192 = smul.u32 16, %s26
          %p193 = scmp.lt.s32.totalorder %s25, 1
          %s194 = scalar_select %p193, %s25, 1
          %p195 = scmp.lt.s32.totalorder %s192, 15
          %s196 = scalar_select %p195, %s192, 15
          %s197 = smul.addr %s194, 16
          %s198 = sadd.s32 %s196, %s197
          %s199 = smul.addr %s198, 8
          %s200 = scalar_lea.vmem %s1, %s199
          %s201 = smul.u32 16, %s26
        $region28: #{tpu_custom_call.1} parent=23 // pred_fallthru
          _
      $region24: #{tpu_custom_call.1} parent=5 // pred_fallthru
        _
      %p202 = scmp.le.s32.totalorder 1, %s18
      %p203 = scmp.lt.s32.totalorder %s18, 3
      %p204 = pnand %p202, %p203
      %p205 = pneg %p204
      // Predicated region
      $region29: #{tpu_custom_call.1} parent=5 // pred_check
        _
      $region30: #{tpu_custom_call.1} parent=5 // pred_check_branch
        %207 = sbr.rel (%p204) target = $region32
      $region31: #{tpu_custom_call.1} parent=5 // pred_region
        %s208 = ssub.s32 %s18, 1
        // Predicated region
        $region33: #{tpu_custom_call.1} parent=31 // pred_check
          %p209 = pneg %p51
        $region34: #{tpu_custom_call.1} parent=31 // pred_check_branch
          %211 = sbr.rel (%p209) target = $region36
        $region35: #{tpu_custom_call.1} parent=31 // pred_region
          %212 = dma.done [#allocation4], 16
        $region36: #{tpu_custom_call.1} parent=31 // pred_fallthru
          _
        %213 = sfence
        %p214 = pneg %p51
        %p215 = pneg %p48
        %s216 = smul.u32 16, %s28
        %p217 = scmp.lt.s32.totalorder %s27, 1
        %s218 = scalar_select %p217, %s27, 1
        %p219 = scmp.lt.s32.totalorder %s216, 15
        %s220 = scalar_select %p219, %s216, 15
        %s221 = smul.addr %s218, 16
        %s222 = sadd.s32 %s220, %s221
        %s223 = smul.addr %s222, 8
        %s224 = scalar_lea.vmem %s1, %s223
        %p225 = pneg %p79
        %p226 = pneg %p76
        %p227 = pneg %p100
        %p228 = pneg %p97
        %p229 = pneg %p128
        %p230 = pneg %p125
        %s231 = sand.u32 %s115, 1
        %s232 = scalar_lea.sflag [#allocation3], %s231
        %s233 = sand.u32 %s115, 1
        %s234 = scalar_lea.vmem [#allocation5], %s233
        %p235 = pneg %p156
        %p236 = pneg %p153
        %s237 = sand.u32 %s143, 1
        %s238 = scalar_lea.sflag [#allocation7], %s237
        %s239 = sand.u32 %s143, 1
        %s240 = scalar_lea.vmem [#allocation6], %s239
        %s241 = smul.u32 16, %s28
        %p242 = scmp.lt.s32.totalorder %s27, 1
        %s243 = scalar_select %p242, %s27, 1
        %p244 = scmp.lt.s32.totalorder %s241, 15
        %s245 = scalar_select %p244, %s241, 15
        %s246 = smul.addr %s243, 16
        %s247 = sadd.s32 %s245, %s246
        %s248 = smul.addr %s247, 8
        %s249 = scalar_lea.vmem %s1, %s248
        %s250 = smul.u32 16, %s28
        %v251 = vld [vmem:[%s249] sm:$0xff]
        %v252 = vld [vmem:[%s249 + $0x8] sm:$0xff]
        %v253 = vld [vmem:[%s249 + $0x10] sm:$0xff]
        %v254 = vld [vmem:[%s249 + $0x18] sm:$0xff]
        %v255 = vld [vmem:[%s249 + $0x20] sm:$0xff]
        %v256 = vld [vmem:[%s249 + $0x28] sm:$0xff]
        %v257 = vld [vmem:[%s249 + $0x30] sm:$0xff]
        %v258 = vld [vmem:[%s249 + $0x38] sm:$0xff]
        %v259 = vld [vmem:[%s249 + $0x40] sm:$0xff]
        %v260 = vld [vmem:[%s249 + $0x48] sm:$0xff]
        %v261 = vld [vmem:[%s249 + $0x50] sm:$0xff]
        %v262 = vld [vmem:[%s249 + $0x58] sm:$0xff]
        %v263 = vld [vmem:[%s249 + $0x60] sm:$0xff]
        %v264 = vld [vmem:[%s249 + $0x68] sm:$0xff]
        %v265 = vld [vmem:[%s249 + $0x70] sm:$0xff]
        %v266 = vld [vmem:[%s249 + $0x78] sm:$0xff]
        %v267 = vld [vmem:[%s2] sm:$0xff]
        %v268 = vld [vmem:[%s2 + $0x8] sm:$0xff]
        %v269 = vld [vmem:[%s2 + $0x10] sm:$0xff]
        %v270 = vld [vmem:[%s2 + $0x18] sm:$0xff]
        %vm271 = vcmask 261120
        %v273 = vsel %vm271, %v251, 0
        %v276 = vsel %vm271, %v252, 0
        %v279 = vsel %vm271, %v253, 0
        %v282 = vsel %vm271, %v254, 0
        %v285 = vsel %vm271, %v255, 0
        %v288 = vsel %vm271, %v256, 0
        %v291 = vsel %vm271, %v257, 0
        %v294 = vsel %vm271, %v258, 0
        %v297 = vsel %vm271, %v259, 0
        %v300 = vsel %vm271, %v260, 0
        %v303 = vsel %vm271, %v261, 0
        %v306 = vsel %vm271, %v262, 0
        %v309 = vsel %vm271, %v263, 0
        %v312 = vsel %vm271, %v264, 0
        %v315 = vsel %vm271, %v265, 0
        %v318 = vsel %vm271, %v266, 0
        %320 = vmatprep.subr.mxu0 0.0
        %v321 = vand.u32 %v267, 4294901760
        %322 = vmatpush1.msra.mxu0 %v321
        %323 = vmatprep.subr.mxu0 0.0
        %v324 = vand.u32 %v268, 4294901760
        %325 = vmatpush1.msra.mxu0 %v324
        %326 = vmatprep.subr.mxu0 0.0
        %v327 = vand.u32 %v269, 4294901760
        %328 = vmatpush1.msra.mxu0 %v327
        %329 = vmatprep.subr.mxu0 0.0
        %v330 = vand.u32 %v270, 4294901760
        %331 = vmatpush1.msra.mxu0 %v330
        %332 = vmatprep.subr.mxu0 0.0
        %333 = vmatpush1.msra.mxu0 0.0
        %334 = vmatprep.subr.mxu0 0.0
        %335 = vmatpush1.msra.mxu0 0.0
        %336 = vmatprep.subr.mxu0 0.0
        %337 = vmatpush1.msra.mxu0 0.0
        %338 = vmatprep.subr.mxu0 0.0
        %339 = vmatpush1.msra.mxu0 0.0
        %340 = vmatprep.subr.mxu0 0.0
        %341 = vmatpush1.msra.mxu0 0.0
        %342 = vmatprep.subr.mxu0 0.0
        %343 = vmatpush1.msra.mxu0 0.0
        %344 = vmatprep.subr.mxu0 0.0
        %345 = vmatpush1.msra.mxu0 0.0
        %346 = vmatprep.subr.mxu0 0.0
        %347 = vmatpush1.msra.mxu0 0.0
        %348 = vmatprep.subr.mxu0 0.0
        %349 = vmatpush1.msra.mxu0 0.0
        %350 = vmatprep.subr.mxu0 0.0
        %351 = vmatpush1.msra.mxu0 0.0
        %352 = vmatprep.subr.mxu0 0.0
        %353 = vmatpush1.msra.mxu0 0.0
        %354 = vmatprep.subr.mxu0 0.0
        %355 = vmatpush1.msra.mxu0 0.0
        %356 = vmatprep.subr.mxu0 0.0
        %357 = vmatpush1.msra.mxu0 0.0
        %358 = vmatprep.subr.mxu0 0.0
        %359 = vmatpush1.msra.mxu0 0.0
        %360 = vmatprep.subr.mxu0 0.0
        %361 = vmatpush1.msra.mxu0 0.0
        %362 = vmatprep.subr.mxu0 0.0
        %363 = vmatpush1.msra.mxu0 0.0
        %364 = vmatprep.subr.mxu0 0.0
        %365 = vmatpush1.msra.mxu0 0.0
        %366 = vmatprep.subr.mxu0 0.0
        %367 = vmatpush1.msra.mxu0 0.0
        %368 = vmatprep.subr.mxu0 0.0
        %369 = vmatpush1.msra.mxu0 0.0
        %370 = vmatprep.subr.mxu0 0.0
        %371 = vmatpush1.msra.mxu0 0.0
        %372 = vmatprep.subr.mxu0 0.0
        %373 = vmatpush1.msra.mxu0 0.0
        %374 = vmatprep.subr.mxu0 0.0
        %375 = vmatpush1.msra.mxu0 0.0
        %376 = vmatprep.subr.mxu0 0.0
        %377 = vmatpush1.msra.mxu0 0.0
        %378 = vmatprep.subr.mxu0 0.0
        %379 = vmatpush1.msra.mxu0 0.0
        %380 = vmatprep.subr.mxu0 0.0
        %381 = vmatpush1.msra.mxu0 0.0
        %382 = vmatprep.subr.mxu0 0.0
        %383 = vmatpush1.msra.mxu0 0.0
        %384 = vmatprep.subr.mxu0 0.0
        %385 = vmatpush1.msra.mxu0 0.0
        %386 = vmatprep.subr.mxu0 0.0
        %387 = vmatpush1.msra.mxu0 0.0
        %388 = vmatprep.mubr.f32.mxu0 0.0
        %v389 = vand.u32 %v273, 4294901760
        %v390 = vsub.f32 %v273, %v389
        %v391 = vand.u32 %v390, 4294901760
        %v392 = vsub.f32 %v390, %v391
        %v393 = vand.u32 %v392, 4294901760
        %394 = vmatmul.mubr.f32.gmra.mrb[0].mxu0 %v393
        %v395 = vpop.f32.mrb[0].mxu0
        %v396 = vadd.f32 0.0, %v395
        %v397 = vpop.f32.mrb[0].mxu0
        %398 = vmatprep.mubr.f32.mxu0 0.0
        %v399 = vand.u32 %v276, 4294901760
        %v400 = vsub.f32 %v276, %v399
        %v401 = vand.u32 %v400, 4294901760
        %v402 = vsub.f32 %v400, %v401
        %v403 = vand.u32 %v402, 4294901760
        %404 = vmatmul.mubr.f32.gmra.mrb[0].mxu0 %v403
        %v405 = vpop.f32.mrb[0].mxu0
        %v406 = vadd.f32 0.0, %v405
        %v407 = vpop.f32.mrb[0].mxu0
        %408 = vmatprep.mubr.f32.mxu0 0.0
        %v409 = vand.u32 %v279, 4294901760
        %v410 = vsub.f32 %v279, %v409
        %v411 = vand.u32 %v410, 4294901760
        %v412 = vsub.f32 %v410, %v411
        %v413 = vand.u32 %v412, 4294901760
        %414 = vmatmul.mubr.f32.gmra.mrb[0].mxu0 %v413
        %v415 = vpop.f32.mrb[0].mxu0
        %v416 = vadd.f32 0.0, %v415
        %v417 = vpop.f32.mrb[0].mxu0
        %418 = vmatprep.mubr.f32.mxu0 0.0
        %v419 = vand.u32 %v282, 4294901760
        %v420 = vsub.f32 %v282, %v419
        %v421 = vand.u32 %v420, 4294901760
        %v422 = vsub.f32 %v420, %v421
        %v423 = vand.u32 %v422, 4294901760
        %424 = vmatmul.mubr.f32.gmra.mrb[0].mxu0 %v423
        %v425 = vpop.f32.mrb[0].mxu0
        %v426 = vadd.f32 0.0, %v425
        %v427 = vpop.f32.mrb[0].mxu0
        %428 = vmatprep.mubr.f32.mxu0 0.0
        %v429 = vand.u32 %v285, 4294901760
        %v430 = vsub.f32 %v285, %v429
        %v431 = vand.u32 %v430, 4294901760
        %v432 = vsub.f32 %v430, %v431
        %v433 = vand.u32 %v432, 4294901760
        %434 = vmatmul.mubr.f32.gmra.mrb[0].mxu0 %v433
        %v435 = vpop.f32.mrb[0].mxu0
        %v436 = vadd.f32 0.0, %v435
        %v437 = vpop.f32.mrb[0].mxu0
        %438 = vmatprep.mubr.f32.mxu0 0.0
        %v439 = vand.u32 %v288, 4294901760
        %v440 = vsub.f32 %v288, %v439
        %v441 = vand.u32 %v440, 4294901760
        %v442 = vsub.f32 %v440, %v441
        %v443 = vand.u32 %v442, 4294901760
        %444 = vmatmul.mubr.f32.gmra.mrb[0].mxu0 %v443
        %v445 = vpop.f32.mrb[0].mxu0
        %v446 = vadd.f32 0.0, %v445
        %v447 = vpop.f32.mrb[0].mxu0
        %448 = vmatprep.mubr.f32.mxu0 0.0
        %v449 = vand.u32 %v291, 4294901760
        %v450 = vsub.f32 %v291, %v449
        %v451 = vand.u32 %v450, 4294901760
        %v452 = vsub.f32 %v450, %v451
        %v453 = vand.u32 %v452, 4294901760
        %454 = vmatmul.mubr.f32.gmra.mrb[0].mxu0 %v453
        %v455 = vpop.f32.mrb[0].mxu0
        %v456 = vadd.f32 0.0, %v455
        %v457 = vpop.f32.mrb[0].mxu0
        %458 = vmatprep.mubr.f32.mxu0 0.0
        %v459 = vand.u32 %v294, 4294901760
        %v460 = vsub.f32 %v294, %v459
        %v461 = vand.u32 %v460, 4294901760
        %v462 = vsub.f32 %v460, %v461
        %v463 = vand.u32 %v462, 4294901760
        %464 = vmatmul.mubr.f32.gmra.mrb[0].mxu0 %v463
        %v465 = vpop.f32.mrb[0].mxu0
        %v466 = vadd.f32 0.0, %v465
        %v467 = vpop.f32.mrb[0].mxu0
        %468 = vmatprep.mubr.f32.mxu0 0.0
        %v469 = vand.u32 %v297, 4294901760
        %v470 = vsub.f32 %v297, %v469
        %v471 = vand.u32 %v470, 4294901760
        %v472 = vsub.f32 %v470, %v471
        %v473 = vand.u32 %v472, 4294901760
        %474 = vmatmul.mubr.f32.gmra.mrb[0].mxu0 %v473
        %v475 = vpop.f32.mrb[0].mxu0
        %v476 = vadd.f32 0.0, %v475
        %v477 = vpop.f32.mrb[0].mxu0
        %478 = vmatprep.mubr.f32.mxu0 0.0
        %v479 = vand.u32 %v300, 4294901760
        %v480 = vsub.f32 %v300, %v479
        %v481 = vand.u32 %v480, 4294901760
        %v482 = vsub.f32 %v480, %v481
        %v483 = vand.u32 %v482, 4294901760
        %484 = vmatmul.mubr.f32.gmra.mrb[0].mxu0 %v483
        %v485 = vpop.f32.mrb[0].mxu0
        %v486 = vadd.f32 0.0, %v485
        %v487 = vpop.f32.mrb[0].mxu0
        %488 = vmatprep.mubr.f32.mxu0 0.0
        %v489 = vand.u32 %v303, 4294901760
        %v490 = vsub.f32 %v303, %v489
        %v491 = vand.u32 %v490, 4294901760
        %v492 = vsub.f32 %v490, %v491
        %v493 = vand.u32 %v492, 4294901760
        %494 = vmatmul.mubr.f32.gmra.mrb[0].mxu0 %v493
        %v495 = vpop.f32.mrb[0].mxu0
        %v496 = vadd.f32 0.0, %v495
        %v497 = vpop.f32.mrb[0].mxu0
        %498 = vmatprep.mubr.f32.mxu0 0.0
        %v499 = vand.u32 %v306, 4294901760
        %v500 = vsub.f32 %v306, %v499
        %v501 = vand.u32 %v500, 4294901760
        %v502 = vsub.f32 %v500, %v501
        %v503 = vand.u32 %v502, 4294901760
        %504 = vmatmul.mubr.f32.gmra.mrb[0].mxu0 %v503
        %v505 = vpop.f32.mrb[0].mxu0
        %v506 = vadd.f32 0.0, %v505
        %v507 = vpop.f32.mrb[0].mxu0
        %508 = vmatprep.mubr.f32.mxu0 0.0
        %v509 = vand.u32 %v309, 4294901760
        %v510 = vsub.f32 %v309, %v509
        %v511 = vand.u32 %v510, 4294901760
        %v512 = vsub.f32 %v510, %v511
        %v513 = vand.u32 %v512, 4294901760
        %514 = vmatmul.mubr.f32.gmra.mrb[0].mxu0 %v513
        %v515 = vpop.f32.mrb[0].mxu0
        %v516 = vadd.f32 0.0, %v515
        %v517 = vpop.f32.mrb[0].mxu0
        %518 = vmatprep.mubr.f32.mxu0 0.0
        %v519 = vand.u32 %v312, 4294901760
        %v520 = vsub.f32 %v312, %v519
        %v521 = vand.u32 %v520, 4294901760
        %v522 = vsub.f32 %v520, %v521
        %v523 = vand.u32 %v522, 4294901760
        %524 = vmatmul.mubr.f32.gmra.mrb[0].mxu0 %v523
        %v525 = vpop.f32.mrb[0].mxu0
        %v526 = vadd.f32 0.0, %v525
        %v527 = vpop.f32.mrb[0].mxu0
        %528 = vmatprep.mubr.f32.mxu0 0.0
        %v529 = vand.u32 %v315, 4294901760
        %v530 = vsub.f32 %v315, %v529
        %v531 = vand.u32 %v530, 4294901760
        %v532 = vsub.f32 %v530, %v531
        %v533 = vand.u32 %v532, 4294901760
        %534 = vmatmul.mubr.f32.gmra.mrb[0].mxu0 %v533
        %v535 = vpop.f32.mrb[0].mxu0
        %v536 = vadd.f32 0.0, %v535
        %v537 = vpop.f32.mrb[0].mxu0
        %538 = vmatprep.mubr.f32.mxu0 0.0
        %v539 = vand.u32 %v318, 4294901760
        %v540 = vsub.f32 %v318, %v539
        %v541 = vand.u32 %v540, 4294901760
        %v542 = vsub.f32 %v540, %v541
        %v543 = vand.u32 %v542, 4294901760
        %544 = vmatmul.mubr.f32.gmra.mrb[0].mxu0 %v543
        %v545 = vpop.f32.mrb[0].mxu0
        %v546 = vadd.f32 0.0, %v545
        %v547 = vpop.f32.mrb[0].mxu0
        %548 = vdwg.mxu0
        %549 = vmatprep.subr.mxu0 0.0
        %v550 = vand.u32 %v267, 4294901760
        %v551 = vsub.f32 %v267, %v550
        %v552 = vand.u32 %v551, 4294901760
        %v553 = vsub.f32 %v551, %v552
        %v554 = vand.u32 %v553, 4294901760
        %555 = vmatpush1.msra.mxu0 %v554
        %556 = vmatprep.subr.mxu0 0.0
        %v557 = vand.u32 %v268, 4294901760
        %v558 = vsub.f32 %v268, %v557
        %v559 = vand.u32 %v558, 4294901760
        %v560 = vsub.f32 %v558, %v559
        %v561 = vand.u32 %v560, 4294901760
        %562 = vmatpush1.msra.mxu0 %v561
        %563 = vmatprep.subr.mxu0 0.0
        %v564 = vand.u32 %v269, 4294901760
        %v565 = vsub.f32 %v269, %v564
        %v566 = vand.u32 %v565, 4294901760
        %v567 = vsub.f32 %v565, %v566
        %v568 = vand.u32 %v567, 4294901760
        %569 = vmatpush1.msra.mxu0 %v568
        %570 = vmatprep.subr.mxu0 0.0
        %v571 = vand.u32 %v270, 4294901760
        %v572 = vsub.f32 %v270, %v571
        %v573 = vand.u32 %v572, 4294901760
        %v574 = vsub.f32 %v572, %v573
        %v575 = vand.u32 %v574, 4294901760
        %576 = vmatpush1.msra.mxu0 %v575
        %577 = vmatprep.subr.mxu0 0.0
        %578 = vmatpush1.msra.mxu0 0.0
        %579 = vmatprep.subr.mxu0 0.0
        %580 = vmatpush1.msra.mxu0 0.0
        %581 = vmatprep.subr.mxu0 0.0
        %582 = vmatpush1.msra.mxu0 0.0
        %583 = vmatprep.subr.mxu0 0.0
        %584 = vmatpush1.msra.mxu0 0.0
        %585 = vmatprep.subr.mxu0 0.0
        %586 = vmatpush1.msra.mxu0 0.0
        %587 = vmatprep.subr.mxu0 0.0
        %588 = vmatpush1.msra.mxu0 0.0
        %589 = vmatprep.subr.mxu0 0.0
        %590 = vmatpush1.msra.mxu0 0.0
        %591 = vmatprep.subr.mxu0 0.0
        %592 = vmatpush1.msra.mxu0 0.0
        %593 = vmatprep.subr.mxu0 0.0
        %594 = vmatpush1.msra.mxu0 0.0
        %595 = vmatprep.subr.mxu0 0.0
        %596 = vmatpush1.msra.mxu0 0.0
        %597 = vmatprep.subr.mxu0 0.0
        %598 = vmatpush1.msra.mxu0 0.0
        %599 = vmatprep.subr.mxu0 0.0
        %600 = vmatpush1.msra.mxu0 0.0
        %601 = vmatprep.subr.mxu0 0.0
        %602 = vmatpush1.msra.mxu0 0.0
        %603 = vmatprep.subr.mxu0 0.0
        %604 = vmatpush1.msra.mxu0 0.0
        %605 = vmatprep.subr.mxu0 0.0
        %606 = vmatpush1.msra.mxu0 0.0
        %607 = vmatprep.subr.mxu0 0.0
        %608 = vmatpush1.msra.mxu0 0.0
        %609 = vmatprep.subr.mxu0 0.0
        %610 = vmatpush1.msra.mxu0 0.0
        %611 = vmatprep.subr.mxu0 0.0
        %612 = vmatpush1.msra.mxu0 0.0
        %613 = vmatprep.subr.mxu0 0.0
        %614 = vmatpush1.msra.mxu0 0.0
        %615 = vmatprep.subr.mxu0 0.0
        %616 = vmatpush1.msra.mxu0 0.0
        %617 = vmatprep.subr.mxu0 0.0
        %618 = vmatpush1.msra.mxu0 0.0
        %619 = vmatprep.subr.mxu0 0.0
        %620 = vmatpush1.msra.mxu0 0.0
        %621 = vmatprep.subr.mxu0 0.0
        %622 = vmatpush1.msra.mxu0 0.0
        %623 = vmatprep.subr.mxu0 0.0
        %624 = vmatpush1.msra.mxu0 0.0
        %625 = vmatprep.subr.mxu0 0.0
        %626 = vmatpush1.msra.mxu0 0.0
        %627 = vmatprep.subr.mxu0 0.0
        %628 = vmatpush1.msra.mxu0 0.0
        %629 = vmatprep.subr.mxu0 0.0
        %630 = vmatpush1.msra.mxu0 0.0
        %631 = vmatprep.subr.mxu0 0.0
        %632 = vmatpush1.msra.mxu0 0.0
        %633 = vmatprep.mubr.f32.mxu0 0.0
        %v634 = vand.u32 %v273, 4294901760
        %635 = vmatmul.mubr.f32.gmra.mrb[0].mxu0 %v634
        %v636 = vpop.f32.mrb[0].mxu0
        %v637 = vadd.f32 %v396, %v636
        %v638 = vpop.f32.mrb[0].mxu0
        %639 = vmatprep.mubr.f32.mxu0 0.0
        %v640 = vand.u32 %v276, 4294901760
        %641 = vmatmul.mubr.f32.gmra.mrb[0].mxu0 %v640
        %v642 = vpop.f32.mrb[0].mxu0
        %v643 = vadd.f32 %v406, %v642
        %v644 = vpop.f32.mrb[0].mxu0
        %645 = vmatprep.mubr.f32.mxu0 0.0
        %v646 = vand.u32 %v279, 4294901760
        %647 = vmatmul.mubr.f32.gmra.mrb[0].mxu0 %v646
        %v648 = vpop.f32.mrb[0].mxu0
        %v649 = vadd.f32 %v416, %v648
        %v650 = vpop.f32.mrb[0].mxu0
        %651 = vmatprep.mubr.f32.mxu0 0.0
        %v652 = vand.u32 %v282, 4294901760
        %653 = vmatmul.mubr.f32.gmra.mrb[0].mxu0 %v652
        %v654 = vpop.f32.mrb[0].mxu0
        %v655 = vadd.f32 %v426, %v654
        %v656 = vpop.f32.mrb[0].mxu0
        %657 = vmatprep.mubr.f32.mxu0 0.0
        %v658 = vand.u32 %v285, 4294901760
        %659 = vmatmul.mubr.f32.gmra.mrb[0].mxu0 %v658
        %v660 = vpop.f32.mrb[0].mxu0
        %v661 = vadd.f32 %v436, %v660
        %v662 = vpop.f32.mrb[0].mxu0
        %663 = vmatprep.mubr.f32.mxu0 0.0
        %v664 = vand.u32 %v288, 4294901760
        %665 = vmatmul.mubr.f32.gmra.mrb[0].mxu0 %v664
        %v666 = vpop.f32.mrb[0].mxu0
        %v667 = vadd.f32 %v446, %v666
        %v668 = vpop.f32.mrb[0].mxu0
        %669 = vmatprep.mubr.f32.mxu0 0.0
        %v670 = vand.u32 %v291, 4294901760
        %671 = vmatmul.mubr.f32.gmra.mrb[0].mxu0 %v670
        %v672 = vpop.f32.mrb[0].mxu0
        %v673 = vadd.f32 %v456, %v672
        %v674 = vpop.f32.mrb[0].mxu0
        %675 = vmatprep.mubr.f32.mxu0 0.0
        %v676 = vand.u32 %v294, 4294901760
        %677 = vmatmul.mubr.f32.gmra.mrb[0].mxu0 %v676
        %v678 = vpop.f32.mrb[0].mxu0
        %v679 = vadd.f32 %v466, %v678
        %v680 = vpop.f32.mrb[0].mxu0
        %681 = vmatprep.mubr.f32.mxu0 0.0
        %v682 = vand.u32 %v297, 4294901760
        %683 = vmatmul.mubr.f32.gmra.mrb[0].mxu0 %v682
        %v684 = vpop.f32.mrb[0].mxu0
        %v685 = vadd.f32 %v476, %v684
        %v686 = vpop.f32.mrb[0].mxu0
        %687 = vmatprep.mubr.f32.mxu0 0.0
        %v688 = vand.u32 %v300, 4294901760
        %689 = vmatmul.mubr.f32.gmra.mrb[0].mxu0 %v688
        %v690 = vpop.f32.mrb[0].mxu0
        %v691 = vadd.f32 %v486, %v690
        %v692 = vpop.f32.mrb[0].mxu0
        %693 = vmatprep.mubr.f32.mxu0 0.0
        %v694 = vand.u32 %v303, 4294901760
        %695 = vmatmul.mubr.f32.gmra.mrb[0].mxu0 %v694
        %v696 = vpop.f32.mrb[0].mxu0
        %v697 = vadd.f32 %v496, %v696
        %v698 = vpop.f32.mrb[0].mxu0
        %699 = vmatprep.mubr.f32.mxu0 0.0
        %v700 = vand.u32 %v306, 4294901760
        %701 = vmatmul.mubr.f32.gmra.mrb[0].mxu0 %v700
        %v702 = vpop.f32.mrb[0].mxu0
        %v703 = vadd.f32 %v506, %v702
        %v704 = vpop.f32.mrb[0].mxu0
        %705 = vmatprep.mubr.f32.mxu0 0.0
        %v706 = vand.u32 %v309, 4294901760
        %707 = vmatmul.mubr.f32.gmra.mrb[0].mxu0 %v706
        %v708 = vpop.f32.mrb[0].mxu0
        %v709 = vadd.f32 %v516, %v708
        %v710 = vpop.f32.mrb[0].mxu0
        %711 = vmatprep.mubr.f32.mxu0 0.0
        %v712 = vand.u32 %v312, 4294901760
        %713 = vmatmul.mubr.f32.gmra.mrb[0].mxu0 %v712
        %v714 = vpop.f32.mrb[0].mxu0
        %v715 = vadd.f32 %v526, %v714
        %v716 = vpop.f32.mrb[0].mxu0
        %717 = vmatprep.mubr.f32.mxu0 0.0
        %v718 = vand.u32 %v315, 4294901760
        %719 = vmatmul.mubr.f32.gmra.mrb[0].mxu0 %v718
        %v720 = vpop.f32.mrb[0].mxu0
        %v721 = vadd.f32 %v536, %v720
        %v722 = vpop.f32.mrb[0].mxu0
        %723 = vmatprep.mubr.f32.mxu0 0.0
        %v724 = vand.u32 %v318, 4294901760
        %725 = vmatmul.mubr.f32.gmra.mrb[0].mxu0 %v724
        %v726 = vpop.f32.mrb[0].mxu0
        %v727 = vadd.f32 %v546, %v726
        %v728 = vpop.f32.mrb[0].mxu0
        %729 = vdwg.mxu0
        %730 = vmatprep.subr.mxu0 0.0
        %v731 = vand.u32 %v267, 4294901760
        %v732 = vsub.f32 %v267, %v731
        %733 = vmatpush1.msra.mxu0 %v732
        %734 = vmatprep.subr.mxu0 0.0
        %v735 = vand.u32 %v268, 4294901760
        %v736 = vsub.f32 %v268, %v735
        %737 = vmatpush1.msra.mxu0 %v736
        %738 = vmatprep.subr.mxu0 0.0
        %v739 = vand.u32 %v269, 4294901760
        %v740 = vsub.f32 %v269, %v739
        %741 = vmatpush1.msra.mxu0 %v740
        %742 = vmatprep.subr.mxu0 0.0
        %v743 = vand.u32 %v270, 4294901760
        %v744 = vsub.f32 %v270, %v743
        %745 = vmatpush1.msra.mxu0 %v744
        %746 = vmatprep.subr.mxu0 0.0
        %747 = vmatpush1.msra.mxu0 0.0
        %748 = vmatprep.subr.mxu0 0.0
        %749 = vmatpush1.msra.mxu0 0.0
        %750 = vmatprep.subr.mxu0 0.0
        %751 = vmatpush1.msra.mxu0 0.0
        %752 = vmatprep.subr.mxu0 0.0
        %753 = vmatpush1.msra.mxu0 0.0
        %754 = vmatprep.subr.mxu0 0.0
        %755 = vmatpush1.msra.mxu0 0.0
        %756 = vmatprep.subr.mxu0 0.0
        %757 = vmatpush1.msra.mxu0 0.0
        %758 = vmatprep.subr.mxu0 0.0
        %759 = vmatpush1.msra.mxu0 0.0
        %760 = vmatprep.subr.mxu0 0.0
        %761 = vmatpush1.msra.mxu0 0.0
        %762 = vmatprep.subr.mxu0 0.0
        %763 = vmatpush1.msra.mxu0 0.0
        %764 = vmatprep.subr.mxu0 0.0
        %765 = vmatpush1.msra.mxu0 0.0
        %766 = vmatprep.subr.mxu0 0.0
        %767 = vmatpush1.msra.mxu0 0.0
        %768 = vmatprep.subr.mxu0 0.0
        %769 = vmatpush1.msra.mxu0 0.0
        %770 = vmatprep.subr.mxu0 0.0
        %771 = vmatpush1.msra.mxu0 0.0
        %772 = vmatprep.subr.mxu0 0.0
        %773 = vmatpush1.msra.mxu0 0.0
        %774 = vmatprep.subr.mxu0 0.0
        %775 = vmatpush1.msra.mxu0 0.0
        %776 = vmatprep.subr.mxu0 0.0
        %777 = vmatpush1.msra.mxu0 0.0
        %778 = vmatprep.subr.mxu0 0.0
        %779 = vmatpush1.msra.mxu0 0.0
        %780 = vmatprep.subr.mxu0 0.0
        %781 = vmatpush1.msra.mxu0 0.0
        %782 = vmatprep.subr.mxu0 0.0
        %783 = vmatpush1.msra.mxu0 0.0
        %784 = vmatprep.subr.mxu0 0.0
        %785 = vmatpush1.msra.mxu0 0.0
        %786 = vmatprep.subr.mxu0 0.0
        %787 = vmatpush1.msra.mxu0 0.0
        %788 = vmatprep.subr.mxu0 0.0
        %789 = vmatpush1.msra.mxu0 0.0
        %790 = vmatprep.subr.mxu0 0.0
        %791 = vmatpush1.msra.mxu0 0.0
        %792 = vmatprep.subr.mxu0 0.0
        %793 = vmatpush1.msra.mxu0 0.0
        %794 = vmatprep.subr.mxu0 0.0
        %795 = vmatpush1.msra.mxu0 0.0
        %796 = vmatprep.subr.mxu0 0.0
        %797 = vmatpush1.msra.mxu0 0.0
        %798 = vmatprep.subr.mxu0 0.0
        %799 = vmatpush1.msra.mxu0 0.0
        %800 = vmatprep.subr.mxu0 0.0
        %801 = vmatpush1.msra.mxu0 0.0
        %802 = vmatprep.mubr.f32.mxu0 0.0
        %v803 = vand.u32 %v273, 4294901760
        %v804 = vsub.f32 %v273, %v803
        %805 = vmatmul.mubr.f32.gmra.mrb[0].mxu0 %v804
        %v806 = vpop.f32.mrb[0].mxu0
        %v807 = vadd.f32 %v637, %v806
        %v808 = vpop.f32.mrb[0].mxu0
        %809 = vmatprep.mubr.f32.mxu0 0.0
        %v810 = vand.u32 %v276, 4294901760
        %v811 = vsub.f32 %v276, %v810
        %812 = vmatmul.mubr.f32.gmra.mrb[0].mxu0 %v811
        %v813 = vpop.f32.mrb[0].mxu0
        %v814 = vadd.f32 %v643, %v813
        %v815 = vpop.f32.mrb[0].mxu0
        %816 = vmatprep.mubr.f32.mxu0 0.0
        %v817 = vand.u32 %v279, 4294901760
        %v818 = vsub.f32 %v279, %v817
        %819 = vmatmul.mubr.f32.gmra.mrb[0].mxu0 %v818
        %v820 = vpop.f32.mrb[0].mxu0
        %v821 = vadd.f32 %v649, %v820
        %v822 = vpop.f32.mrb[0].mxu0
        %823 = vmatprep.mubr.f32.mxu0 0.0
        %v824 = vand.u32 %v282, 4294901760
        %v825 = vsub.f32 %v282, %v824
        %826 = vmatmul.mubr.f32.gmra.mrb[0].mxu0 %v825
        %v827 = vpop.f32.mrb[0].mxu0
        %v828 = vadd.f32 %v655, %v827
        %v829 = vpop.f32.mrb[0].mxu0
        %830 = vmatprep.mubr.f32.mxu0 0.0
        %v831 = vand.u32 %v285, 4294901760
        %v832 = vsub.f32 %v285, %v831
        %833 = vmatmul.mubr.f32.gmra.mrb[0].mxu0 %v832
        %v834 = vpop.f32.mrb[0].mxu0
        %v835 = vadd.f32 %v661, %v834
        %v836 = vpop.f32.mrb[0].mxu0
        %837 = vmatprep.mubr.f32.mxu0 0.0
        %v838 = vand.u32 %v288, 4294901760
        %v839 = vsub.f32 %v288, %v838
        %840 = vmatmul.mubr.f32.gmra.mrb[0].mxu0 %v839
        %v841 = vpop.f32.mrb[0].mxu0
        %v842 = vadd.f32 %v667, %v841
        %v843 = vpop.f32.mrb[0].mxu0
        %844 = vmatprep.mubr.f32.mxu0 0.0
        %v845 = vand.u32 %v291, 4294901760
        %v846 = vsub.f32 %v291, %v845
        %847 = vmatmul.mubr.f32.gmra.mrb[0].mxu0 %v846
        %v848 = vpop.f32.mrb[0].mxu0
        %v849 = vadd.f32 %v673, %v848
        %v850 = vpop.f32.mrb[0].mxu0
        %851 = vmatprep.mubr.f32.mxu0 0.0
        %v852 = vand.u32 %v294, 4294901760
        %v853 = vsub.f32 %v294, %v852
        %854 = vmatmul.mubr.f32.gmra.mrb[0].mxu0 %v853
        %v855 = vpop.f32.mrb[0].mxu0
        %v856 = vadd.f32 %v679, %v855
        %v857 = vpop.f32.mrb[0].mxu0
        %858 = vmatprep.mubr.f32.mxu0 0.0
        %v859 = vand.u32 %v297, 4294901760
        %v860 = vsub.f32 %v297, %v859
        %861 = vmatmul.mubr.f32.gmra.mrb[0].mxu0 %v860
        %v862 = vpop.f32.mrb[0].mxu0
        %v863 = vadd.f32 %v685, %v862
        %v864 = vpop.f32.mrb[0].mxu0
        %865 = vmatprep.mubr.f32.mxu0 0.0
        %v866 = vand.u32 %v300, 4294901760
        %v867 = vsub.f32 %v300, %v866
        %868 = vmatmul.mubr.f32.gmra.mrb[0].mxu0 %v867
        %v869 = vpop.f32.mrb[0].mxu0
        %v870 = vadd.f32 %v691, %v869
        %v871 = vpop.f32.mrb[0].mxu0
        %872 = vmatprep.mubr.f32.mxu0 0.0
        %v873 = vand.u32 %v303, 4294901760
        %v874 = vsub.f32 %v303, %v873
        %875 = vmatmul.mubr.f32.gmra.mrb[0].mxu0 %v874
        %v876 = vpop.f32.mrb[0].mxu0
        %v877 = vadd.f32 %v697, %v876
        %v878 = vpop.f32.mrb[0].mxu0
        %879 = vmatprep.mubr.f32.mxu0 0.0
        %v880 = vand.u32 %v306, 4294901760
        %v881 = vsub.f32 %v306, %v880
        %882 = vmatmul.mubr.f32.gmra.mrb[0].mxu0 %v881
        %v883 = vpop.f32.mrb[0].mxu0
        %v884 = vadd.f32 %v703, %v883
        %v885 = vpop.f32.mrb[0].mxu0
        %886 = vmatprep.mubr.f32.mxu0 0.0
        %v887 = vand.u32 %v309, 4294901760
        %v888 = vsub.f32 %v309, %v887
        %889 = vmatmul.mubr.f32.gmra.mrb[0].mxu0 %v888
        %v890 = vpop.f32.mrb[0].mxu0
        %v891 = vadd.f32 %v709, %v890
        %v892 = vpop.f32.mrb[0].mxu0
        %893 = vmatprep.mubr.f32.mxu0 0.0
        %v894 = vand.u32 %v312, 4294901760
        %v895 = vsub.f32 %v312, %v894
        %896 = vmatmul.mubr.f32.gmra.mrb[0].mxu0 %v895
        %v897 = vpop.f32.mrb[0].mxu0
        %v898 = vadd.f32 %v715, %v897
        %v899 = vpop.f32.mrb[0].mxu0
        %900 = vmatprep.mubr.f32.mxu0 0.0
        %v901 = vand.u32 %v315, 4294901760
        %v902 = vsub.f32 %v315, %v901
        %903 = vmatmul.mubr.f32.gmra.mrb[0].mxu0 %v902
        %v904 = vpop.f32.mrb[0].mxu0
        %v905 = vadd.f32 %v721, %v904
        %v906 = vpop.f32.mrb[0].mxu0
        %907 = vmatprep.mubr.f32.mxu0 0.0
        %v908 = vand.u32 %v318, 4294901760
        %v909 = vsub.f32 %v318, %v908
        %910 = vmatmul.mubr.f32.gmra.mrb[0].mxu0 %v909
        %v911 = vpop.f32.mrb[0].mxu0
        %v912 = vadd.f32 %v727, %v911
        %v913 = vpop.f32.mrb[0].mxu0
        %914 = vdwg.mxu0
        %915 = vmatprep.subr.mxu0 0.0
        %v916 = vand.u32 %v267, 4294901760
        %917 = vmatpush1.msra.mxu0 %v916
        %918 = vmatprep.subr.mxu0 0.0
        %v919 = vand.u32 %v268, 4294901760
        %920 = vmatpush1.msra.mxu0 %v919
        %921 = vmatprep.subr.mxu0 0.0
        %v922 = vand.u32 %v269, 4294901760
        %923 = vmatpush1.msra.mxu0 %v922
        %924 = vmatprep.subr.mxu0 0.0
        %v925 = vand.u32 %v270, 4294901760
        %926 = vmatpush1.msra.mxu0 %v925
        %927 = vmatprep.subr.mxu0 0.0
        %928 = vmatpush1.msra.mxu0 0.0
        %929 = vmatprep.subr.mxu0 0.0
        %930 = vmatpush1.msra.mxu0 0.0
        %931 = vmatprep.subr.mxu0 0.0
        %932 = vmatpush1.msra.mxu0 0.0
        %933 = vmatprep.subr.mxu0 0.0
        %934 = vmatpush1.msra.mxu0 0.0
        %935 = vmatprep.subr.mxu0 0.0
        %936 = vmatpush1.msra.mxu0 0.0
        %937 = vmatprep.subr.mxu0 0.0
        %938 = vmatpush1.msra.mxu0 0.0
        %939 = vmatprep.subr.mxu0 0.0
        %940 = vmatpush1.msra.mxu0 0.0
        %941 = vmatprep.subr.mxu0 0.0
        %942 = vmatpush1.msra.mxu0 0.0
        %943 = vmatprep.subr.mxu0 0.0
        %944 = vmatpush1.msra.mxu0 0.0
        %945 = vmatprep.subr.mxu0 0.0
        %946 = vmatpush1.msra.mxu0 0.0
        %947 = vmatprep.subr.mxu0 0.0
        %948 = vmatpush1.msra.mxu0 0.0
        %949 = vmatprep.subr.mxu0 0.0
        %950 = vmatpush1.msra.mxu0 0.0
        %951 = vmatprep.subr.mxu0 0.0
        %952 = vmatpush1.msra.mxu0 0.0
        %953 = vmatprep.subr.mxu0 0.0
        %954 = vmatpush1.msra.mxu0 0.0
        %955 = vmatprep.subr.mxu0 0.0
        %956 = vmatpush1.msra.mxu0 0.0
        %957 = vmatprep.subr.mxu0 0.0
        %958 = vmatpush1.msra.mxu0 0.0
        %959 = vmatprep.subr.mxu0 0.0
        %960 = vmatpush1.msra.mxu0 0.0
        %961 = vmatprep.subr.mxu0 0.0
        %962 = vmatpush1.msra.mxu0 0.0
        %963 = vmatprep.subr.mxu0 0.0
        %964 = vmatpush1.msra.mxu0 0.0
        %965 = vmatprep.subr.mxu0 0.0
        %966 = vmatpush1.msra.mxu0 0.0
        %967 = vmatprep.subr.mxu0 0.0
        %968 = vmatpush1.msra.mxu0 0.0
        %969 = vmatprep.subr.mxu0 0.0
        %970 = vmatpush1.msra.mxu0 0.0
        %971 = vmatprep.subr.mxu0 0.0
        %972 = vmatpush1.msra.mxu0 0.0
        %973 = vmatprep.subr.mxu0 0.0
        %974 = vmatpush1.msra.mxu0 0.0
        %975 = vmatprep.subr.mxu0 0.0
        %976 = vmatpush1.msra.mxu0 0.0
        %977 = vmatprep.subr.mxu0 0.0
        %978 = vmatpush1.msra.mxu0 0.0
        %979 = vmatprep.subr.mxu0 0.0
        %980 = vmatpush1.msra.mxu0 0.0
        %981 = vmatprep.subr.mxu0 0.0
        %982 = vmatpush1.msra.mxu0 0.0
        %983 = vmatprep.mubr.f32.mxu0 0.0
        %v984 = vand.u32 %v273, 4294901760
        %v985 = vsub.f32 %v273, %v984
        %v986 = vand.u32 %v985, 4294901760
        %987 = vmatmul.mubr.f32.gmra.mrb[0].mxu0 %v986
        %v988 = vpop.f32.mrb[0].mxu0
        %v989 = vadd.f32 %v807, %v988
        %v990 = vpop.f32.mrb[0].mxu0
        %991 = vmatprep.mubr.f32.mxu0 0.0
        %v992 = vand.u32 %v276, 4294901760
        %v993 = vsub.f32 %v276, %v992
        %v994 = vand.u32 %v993, 4294901760
        %995 = vmatmul.mubr.f32.gmra.mrb[0].mxu0 %v994
        %v996 = vpop.f32.mrb[0].mxu0
        %v997 = vadd.f32 %v814, %v996
        %v998 = vpop.f32.mrb[0].mxu0
        %999 = vmatprep.mubr.f32.mxu0 0.0
        %v1000 = vand.u32 %v279, 4294901760
        %v1001 = vsub.f32 %v279, %v1000
        %v1002 = vand.u32 %v1001, 4294901760
        %1003 = vmatmul.mubr.f32.gmra.mrb[0].mxu0 %v1002
        %v1004 = vpop.f32.mrb[0].mxu0
        %v1005 = vadd.f32 %v821, %v1004
        %v1006 = vpop.f32.mrb[0].mxu0
        %1007 = vmatprep.mubr.f32.mxu0 0.0
        %v1008 = vand.u32 %v282, 4294901760
        %v1009 = vsub.f32 %v282, %v1008
        %v1010 = vand.u32 %v1009, 4294901760
        %1011 = vmatmul.mubr.f32.gmra.mrb[0].mxu0 %v1010
        %v1012 = vpop.f32.mrb[0].mxu0
        %v1013 = vadd.f32 %v828, %v1012
        %v1014 = vpop.f32.mrb[0].mxu0
        %1015 = vmatprep.mubr.f32.mxu0 0.0
        %v1016 = vand.u32 %v285, 4294901760
        %v1017 = vsub.f32 %v285, %v1016
        %v1018 = vand.u32 %v1017, 4294901760
        %1019 = vmatmul.mubr.f32.gmra.mrb[0].mxu0 %v1018
        %v1020 = vpop.f32.mrb[0].mxu0
        %v1021 = vadd.f32 %v835, %v1020
        %v1022 = vpop.f32.mrb[0].mxu0
        %1023 = vmatprep.mubr.f32.mxu0 0.0
        %v1024 = vand.u32 %v288, 4294901760
        %v1025 = vsub.f32 %v288, %v1024
        %v1026 = vand.u32 %v1025, 4294901760
        %1027 = vmatmul.mubr.f32.gmra.mrb[0].mxu0 %v1026
        %v1028 = vpop.f32.mrb[0].mxu0
        %v1029 = vadd.f32 %v842, %v1028
        %v1030 = vpop.f32.mrb[0].mxu0
        %1031 = vmatprep.mubr.f32.mxu0 0.0
        %v1032 = vand.u32 %v291, 4294901760
        %v1033 = vsub.f32 %v291, %v1032
        %v1034 = vand.u32 %v1033, 4294901760
        %1035 = vmatmul.mubr.f32.gmra.mrb[0].mxu0 %v1034
        %v1036 = vpop.f32.mrb[0].mxu0
        %v1037 = vadd.f32 %v849, %v1036
        %v1038 = vpop.f32.mrb[0].mxu0
        %1039 = vmatprep.mubr.f32.mxu0 0.0
        %v1040 = vand.u32 %v294, 4294901760
        %v1041 = vsub.f32 %v294, %v1040
        %v1042 = vand.u32 %v1041, 4294901760
        %1043 = vmatmul.mubr.f32.gmra.mrb[0].mxu0 %v1042
        %v1044 = vpop.f32.mrb[0].mxu0
        %v1045 = vadd.f32 %v856, %v1044
        %v1046 = vpop.f32.mrb[0].mxu0
        %1047 = vmatprep.mubr.f32.mxu0 0.0
        %v1048 = vand.u32 %v297, 4294901760
        %v1049 = vsub.f32 %v297, %v1048
        %v1050 = vand.u32 %v1049, 4294901760
        %1051 = vmatmul.mubr.f32.gmra.mrb[0].mxu0 %v1050
        %v1052 = vpop.f32.mrb[0].mxu0
        %v1053 = vadd.f32 %v863, %v1052
        %v1054 = vpop.f32.mrb[0].mxu0
        %1055 = vmatprep.mubr.f32.mxu0 0.0
        %v1056 = vand.u32 %v300, 4294901760
        %v1057 = vsub.f32 %v300, %v1056
        %v1058 = vand.u32 %v1057, 4294901760
        %1059 = vmatmul.mubr.f32.gmra.mrb[0].mxu0 %v1058
        %v1060 = vpop.f32.mrb[0].mxu0
        %v1061 = vadd.f32 %v870, %v1060
        %v1062 = vpop.f32.mrb[0].mxu0
        %1063 = vmatprep.mubr.f32.mxu0 0.0
        %v1064 = vand.u32 %v303, 4294901760
        %v1065 = vsub.f32 %v303, %v1064
        %v1066 = vand.u32 %v1065, 4294901760
        %1067 = vmatmul.mubr.f32.gmra.mrb[0].mxu0 %v1066
        %v1068 = vpop.f32.mrb[0].mxu0
        %v1069 = vadd.f32 %v877, %v1068
        %v1070 = vpop.f32.mrb[0].mxu0
        %1071 = vmatprep.mubr.f32.mxu0 0.0
        %v1072 = vand.u32 %v306, 4294901760
        %v1073 = vsub.f32 %v306, %v1072
        %v1074 = vand.u32 %v1073, 4294901760
        %1075 = vmatmul.mubr.f32.gmra.mrb[0].mxu0 %v1074
        %v1076 = vpop.f32.mrb[0].mxu0
        %v1077 = vadd.f32 %v884, %v1076
        %v1078 = vpop.f32.mrb[0].mxu0
        %1079 = vmatprep.mubr.f32.mxu0 0.0
        %v1080 = vand.u32 %v309, 4294901760
        %v1081 = vsub.f32 %v309, %v1080
        %v1082 = vand.u32 %v1081, 4294901760
        %1083 = vmatmul.mubr.f32.gmra.mrb[0].mxu0 %v1082
        %v1084 = vpop.f32.mrb[0].mxu0
        %v1085 = vadd.f32 %v891, %v1084
        %v1086 = vpop.f32.mrb[0].mxu0
        %1087 = vmatprep.mubr.f32.mxu0 0.0
        %v1088 = vand.u32 %v312, 4294901760
        %v1089 = vsub.f32 %v312, %v1088
        %v1090 = vand.u32 %v1089, 4294901760
        %1091 = vmatmul.mubr.f32.gmra.mrb[0].mxu0 %v1090
        %v1092 = vpop.f32.mrb[0].mxu0
        %v1093 = vadd.f32 %v898, %v1092
        %v1094 = vpop.f32.mrb[0].mxu0
        %1095 = vmatprep.mubr.f32.mxu0 0.0
        %v1096 = vand.u32 %v315, 4294901760
        %v1097 = vsub.f32 %v315, %v1096
        %v1098 = vand.u32 %v1097, 4294901760
        %1099 = vmatmul.mubr.f32.gmra.mrb[0].mxu0 %v1098
        %v1100 = vpop.f32.mrb[0].mxu0
        %v1101 = vadd.f32 %v905, %v1100
        %v1102 = vpop.f32.mrb[0].mxu0
        %1103 = vmatprep.mubr.f32.mxu0 0.0
        %v1104 = vand.u32 %v318, 4294901760
        %v1105 = vsub.f32 %v318, %v1104
        %v1106 = vand.u32 %v1105, 4294901760
        %1107 = vmatmul.mubr.f32.gmra.mrb[0].mxu0 %v1106
        %v1108 = vpop.f32.mrb[0].mxu0
        %v1109 = vadd.f32 %v912, %v1108
        %v1110 = vpop.f32.mrb[0].mxu0
        %1111 = vdwg.mxu0
        %1112 = vmatprep.subr.mxu0 0.0
        %v1113 = vand.u32 %v267, 4294901760
        %v1114 = vsub.f32 %v267, %v1113
        %v1115 = vand.u32 %v1114, 4294901760
        %1116 = vmatpush1.msra.mxu0 %v1115
        %1117 = vmatprep.subr.mxu0 0.0
        %v1118 = vand.u32 %v268, 4294901760
        %v1119 = vsub.f32 %v268, %v1118
        %v1120 = vand.u32 %v1119, 4294901760
        %1121 = vmatpush1.msra.mxu0 %v1120
        %1122 = vmatprep.subr.mxu0 0.0
        %v1123 = vand.u32 %v269, 4294901760
        %v1124 = vsub.f32 %v269, %v1123
        %v1125 = vand.u32 %v1124, 4294901760
        %1126 = vmatpush1.msra.mxu0 %v1125
        %1127 = vmatprep.subr.mxu0 0.0
        %v1128 = vand.u32 %v270, 4294901760
        %v1129 = vsub.f32 %v270, %v1128
        %v1130 = vand.u32 %v1129, 4294901760
        %1131 = vmatpush1.msra.mxu0 %v1130
        %1132 = vmatprep.subr.mxu0 0.0
        %1133 = vmatpush1.msra.mxu0 0.0
        %1134 = vmatprep.subr.mxu0 0.0
        %1135 = vmatpush1.msra.mxu0 0.0
        %1136 = vmatprep.subr.mxu0 0.0
        %1137 = vmatpush1.msra.mxu0 0.0
        %1138 = vmatprep.subr.mxu0 0.0
        %1139 = vmatpush1.msra.mxu0 0.0
        %1140 = vmatprep.subr.mxu0 0.0
        %1141 = vmatpush1.msra.mxu0 0.0
        %1142 = vmatprep.subr.mxu0 0.0
        %1143 = vmatpush1.msra.mxu0 0.0
        %1144 = vmatprep.subr.mxu0 0.0
        %1145 = vmatpush1.msra.mxu0 0.0
        %1146 = vmatprep.subr.mxu0 0.0
        %1147 = vmatpush1.msra.mxu0 0.0
        %1148 = vmatprep.subr.mxu0 0.0
        %1149 = vmatpush1.msra.mxu0 0.0
        %1150 = vmatprep.subr.mxu0 0.0
        %1151 = vmatpush1.msra.mxu0 0.0
        %1152 = vmatprep.subr.mxu0 0.0
        %1153 = vmatpush1.msra.mxu0 0.0
        %1154 = vmatprep.subr.mxu0 0.0
        %1155 = vmatpush1.msra.mxu0 0.0
        %1156 = vmatprep.subr.mxu0 0.0
        %1157 = vmatpush1.msra.mxu0 0.0
        %1158 = vmatprep.subr.mxu0 0.0
        %1159 = vmatpush1.msra.mxu0 0.0
        %1160 = vmatprep.subr.mxu0 0.0
        %1161 = vmatpush1.msra.mxu0 0.0
        %1162 = vmatprep.subr.mxu0 0.0
        %1163 = vmatpush1.msra.mxu0 0.0
        %1164 = vmatprep.subr.mxu0 0.0
        %1165 = vmatpush1.msra.mxu0 0.0
        %1166 = vmatprep.subr.mxu0 0.0
        %1167 = vmatpush1.msra.mxu0 0.0
        %1168 = vmatprep.subr.mxu0 0.0
        %1169 = vmatpush1.msra.mxu0 0.0
        %1170 = vmatprep.subr.mxu0 0.0
        %1171 = vmatpush1.msra.mxu0 0.0
        %1172 = vmatprep.subr.mxu0 0.0
        %1173 = vmatpush1.msra.mxu0 0.0
        %1174 = vmatprep.subr.mxu0 0.0
        %1175 = vmatpush1.msra.mxu0 0.0
        %1176 = vmatprep.subr.mxu0 0.0
        %1177 = vmatpush1.msra.mxu0 0.0
        %1178 = vmatprep.subr.mxu0 0.0
        %1179 = vmatpush1.msra.mxu0 0.0
        %1180 = vmatprep.subr.mxu0 0.0
        %1181 = vmatpush1.msra.mxu0 0.0
        %1182 = vmatprep.subr.mxu0 0.0
        %1183 = vmatpush1.msra.mxu0 0.0
        %1184 = vmatprep.subr.mxu0 0.0
        %1185 = vmatpush1.msra.mxu0 0.0
        %1186 = vmatprep.subr.mxu0 0.0
        %1187 = vmatpush1.msra.mxu0 0.0
        %1188 = vmatprep.mubr.f32.mxu0 0.0
        %v1189 = vand.u32 %v273, 4294901760
        %1190 = vmatmul.mubr.f32.gmra.mrb[0].mxu0 %v1189
        %v1191 = vpop.f32.mrb[0].mxu0
        %v1192 = vadd.f32 %v989, %v1191
        %v1193 = vpop.f32.mrb[0].mxu0
        %1194 = vmatprep.mubr.f32.mxu0 0.0
        %v1195 = vand.u32 %v276, 4294901760
        %1196 = vmatmul.mubr.f32.gmra.mrb[0].mxu0 %v1195
        %v1197 = vpop.f32.mrb[0].mxu0
        %v1198 = vadd.f32 %v997, %v1197
        %v1199 = vpop.f32.mrb[0].mxu0
        %1200 = vmatprep.mubr.f32.mxu0 0.0
        %v1201 = vand.u32 %v279, 4294901760
        %1202 = vmatmul.mubr.f32.gmra.mrb[0].mxu0 %v1201
        %v1203 = vpop.f32.mrb[0].mxu0
        %v1204 = vadd.f32 %v1005, %v1203
        %v1205 = vpop.f32.mrb[0].mxu0
        %1206 = vmatprep.mubr.f32.mxu0 0.0
        %v1207 = vand.u32 %v282, 4294901760
        %1208 = vmatmul.mubr.f32.gmra.mrb[0].mxu0 %v1207
        %v1209 = vpop.f32.mrb[0].mxu0
        %v1210 = vadd.f32 %v1013, %v1209
        %v1211 = vpop.f32.mrb[0].mxu0
        %1212 = vmatprep.mubr.f32.mxu0 0.0
        %v1213 = vand.u32 %v285, 4294901760
        %1214 = vmatmul.mubr.f32.gmra.mrb[0].mxu0 %v1213
        %v1215 = vpop.f32.mrb[0].mxu0
        %v1216 = vadd.f32 %v1021, %v1215
        %v1217 = vpop.f32.mrb[0].mxu0
        %1218 = vmatprep.mubr.f32.mxu0 0.0
        %v1219 = vand.u32 %v288, 4294901760
        %1220 = vmatmul.mubr.f32.gmra.mrb[0].mxu0 %v1219
        %v1221 = vpop.f32.mrb[0].mxu0
        %v1222 = vadd.f32 %v1029, %v1221
        %v1223 = vpop.f32.mrb[0].mxu0
        %1224 = vmatprep.mubr.f32.mxu0 0.0
        %v1225 = vand.u32 %v291, 4294901760
        %1226 = vmatmul.mubr.f32.gmra.mrb[0].mxu0 %v1225
        %v1227 = vpop.f32.mrb[0].mxu0
        %v1228 = vadd.f32 %v1037, %v1227
        %v1229 = vpop.f32.mrb[0].mxu0
        %1230 = vmatprep.mubr.f32.mxu0 0.0
        %v1231 = vand.u32 %v294, 4294901760
        %1232 = vmatmul.mubr.f32.gmra.mrb[0].mxu0 %v1231
        %v1233 = vpop.f32.mrb[0].mxu0
        %v1234 = vadd.f32 %v1045, %v1233
        %v1235 = vpop.f32.mrb[0].mxu0
        %1236 = vmatprep.mubr.f32.mxu0 0.0
        %v1237 = vand.u32 %v297, 4294901760
        %1238 = vmatmul.mubr.f32.gmra.mrb[0].mxu0 %v1237
        %v1239 = vpop.f32.mrb[0].mxu0
        %v1240 = vadd.f32 %v1053, %v1239
        %v1241 = vpop.f32.mrb[0].mxu0
        %1242 = vmatprep.mubr.f32.mxu0 0.0
        %v1243 = vand.u32 %v300, 4294901760
        %1244 = vmatmul.mubr.f32.gmra.mrb[0].mxu0 %v1243
        %v1245 = vpop.f32.mrb[0].mxu0
        %v1246 = vadd.f32 %v1061, %v1245
        %v1247 = vpop.f32.mrb[0].mxu0
        %1248 = vmatprep.mubr.f32.mxu0 0.0
        %v1249 = vand.u32 %v303, 4294901760
        %1250 = vmatmul.mubr.f32.gmra.mrb[0].mxu0 %v1249
        %v1251 = vpop.f32.mrb[0].mxu0
        %v1252 = vadd.f32 %v1069, %v1251
        %v1253 = vpop.f32.mrb[0].mxu0
        %1254 = vmatprep.mubr.f32.mxu0 0.0
        %v1255 = vand.u32 %v306, 4294901760
        %1256 = vmatmul.mubr.f32.gmra.mrb[0].mxu0 %v1255
        %v1257 = vpop.f32.mrb[0].mxu0
        %v1258 = vadd.f32 %v1077, %v1257
        %v1259 = vpop.f32.mrb[0].mxu0
        %1260 = vmatprep.mubr.f32.mxu0 0.0
        %v1261 = vand.u32 %v309, 4294901760
        %1262 = vmatmul.mubr.f32.gmra.mrb[0].mxu0 %v1261
        %v1263 = vpop.f32.mrb[0].mxu0
        %v1264 = vadd.f32 %v1085, %v1263
        %v1265 = vpop.f32.mrb[0].mxu0
        %1266 = vmatprep.mubr.f32.mxu0 0.0
        %v1267 = vand.u32 %v312, 4294901760
        %1268 = vmatmul.mubr.f32.gmra.mrb[0].mxu0 %v1267
        %v1269 = vpop.f32.mrb[0].mxu0
        %v1270 = vadd.f32 %v1093, %v1269
        %v1271 = vpop.f32.mrb[0].mxu0
        %1272 = vmatprep.mubr.f32.mxu0 0.0
        %v1273 = vand.u32 %v315, 4294901760
        %1274 = vmatmul.mubr.f32.gmra.mrb[0].mxu0 %v1273
        %v1275 = vpop.f32.mrb[0].mxu0
        %v1276 = vadd.f32 %v1101, %v1275
        %v1277 = vpop.f32.mrb[0].mxu0
        %1278 = vmatprep.mubr.f32.mxu0 0.0
        %v1279 = vand.u32 %v318, 4294901760
        %1280 = vmatmul.mubr.f32.gmra.mrb[0].mxu0 %v1279
        %v1281 = vpop.f32.mrb[0].mxu0
        %v1282 = vadd.f32 %v1109, %v1281
        %v1283 = vpop.f32.mrb[0].mxu0
        %1284 = vdwg.mxu0
        %1285 = vmatprep.subr.mxu0 0.0
        %v1286 = vand.u32 %v267, 4294901760
        %1287 = vmatpush1.msra.mxu0 %v1286
        %1288 = vmatprep.subr.mxu0 0.0
        %v1289 = vand.u32 %v268, 4294901760
        %1290 = vmatpush1.msra.mxu0 %v1289
        %1291 = vmatprep.subr.mxu0 0.0
        %v1292 = vand.u32 %v269, 4294901760
        %1293 = vmatpush1.msra.mxu0 %v1292
        %1294 = vmatprep.subr.mxu0 0.0
        %v1295 = vand.u32 %v270, 4294901760
        %1296 = vmatpush1.msra.mxu0 %v1295
        %1297 = vmatprep.subr.mxu0 0.0
        %1298 = vmatpush1.msra.mxu0 0.0
        %1299 = vmatprep.subr.mxu0 0.0
        %1300 = vmatpush1.msra.mxu0 0.0
        %1301 = vmatprep.subr.mxu0 0.0
        %1302 = vmatpush1.msra.mxu0 0.0
        %1303 = vmatprep.subr.mxu0 0.0
        %1304 = vmatpush1.msra.mxu0 0.0
        %1305 = vmatprep.subr.mxu0 0.0
        %1306 = vmatpush1.msra.mxu0 0.0
        %1307 = vmatprep.subr.mxu0 0.0
        %1308 = vmatpush1.msra.mxu0 0.0
        %1309 = vmatprep.subr.mxu0 0.0
        %1310 = vmatpush1.msra.mxu0 0.0
        %1311 = vmatprep.subr.mxu0 0.0
        %1312 = vmatpush1.msra.mxu0 0.0
        %1313 = vmatprep.subr.mxu0 0.0
        %1314 = vmatpush1.msra.mxu0 0.0
        %1315 = vmatprep.subr.mxu0 0.0
        %1316 = vmatpush1.msra.mxu0 0.0
        %1317 = vmatprep.subr.mxu0 0.0
        %1318 = vmatpush1.msra.mxu0 0.0
        %1319 = vmatprep.subr.mxu0 0.0
        %1320 = vmatpush1.msra.mxu0 0.0
        %1321 = vmatprep.subr.mxu0 0.0
        %1322 = vmatpush1.msra.mxu0 0.0
        %1323 = vmatprep.subr.mxu0 0.0
        %1324 = vmatpush1.msra.mxu0 0.0
        %1325 = vmatprep.subr.mxu0 0.0
        %1326 = vmatpush1.msra.mxu0 0.0
        %1327 = vmatprep.subr.mxu0 0.0
        %1328 = vmatpush1.msra.mxu0 0.0
        %1329 = vmatprep.subr.mxu0 0.0
        %1330 = vmatpush1.msra.mxu0 0.0
        %1331 = vmatprep.subr.mxu0 0.0
        %1332 = vmatpush1.msra.mxu0 0.0
        %1333 = vmatprep.subr.mxu0 0.0
        %1334 = vmatpush1.msra.mxu0 0.0
        %1335 = vmatprep.subr.mxu0 0.0
        %1336 = vmatpush1.msra.mxu0 0.0
        %1337 = vmatprep.subr.mxu0 0.0
        %1338 = vmatpush1.msra.mxu0 0.0
        %1339 = vmatprep.subr.mxu0 0.0
        %1340 = vmatpush1.msra.mxu0 0.0
        %1341 = vmatprep.subr.mxu0 0.0
        %1342 = vmatpush1.msra.mxu0 0.0
        %1343 = vmatprep.subr.mxu0 0.0
        %1344 = vmatpush1.msra.mxu0 0.0
        %1345 = vmatprep.subr.mxu0 0.0
        %1346 = vmatpush1.msra.mxu0 0.0
        %1347 = vmatprep.subr.mxu0 0.0
        %1348 = vmatpush1.msra.mxu0 0.0
        %1349 = vmatprep.subr.mxu0 0.0
        %1350 = vmatpush1.msra.mxu0 0.0
        %1351 = vmatprep.subr.mxu0 0.0
        %1352 = vmatpush1.msra.mxu0 0.0
        %1353 = vmatprep.mubr.f32.mxu0 0.0
        %v1354 = vand.u32 %v273, 4294901760
        %1355 = vmatmul.mubr.f32.gmra.mrb[0].mxu0 %v1354
        %v1356 = vpop.f32.mrb[0].mxu0
        %v1357 = vadd.f32 %v1192, %v1356
        %v1358 = vpop.f32.mrb[0].mxu0
        %1359 = vmatprep.mubr.f32.mxu0 0.0
        %v1360 = vand.u32 %v276, 4294901760
        %1361 = vmatmul.mubr.f32.gmra.mrb[0].mxu0 %v1360
        %v1362 = vpop.f32.mrb[0].mxu0
        %v1363 = vadd.f32 %v1198, %v1362
        %v1364 = vpop.f32.mrb[0].mxu0
        %1365 = vmatprep.mubr.f32.mxu0 0.0
        %v1366 = vand.u32 %v279, 4294901760
        %1367 = vmatmul.mubr.f32.gmra.mrb[0].mxu0 %v1366
        %v1368 = vpop.f32.mrb[0].mxu0
        %v1369 = vadd.f32 %v1204, %v1368
        %v1370 = vpop.f32.mrb[0].mxu0
        %1371 = vmatprep.mubr.f32.mxu0 0.0
        %v1372 = vand.u32 %v282, 4294901760
        %1373 = vmatmul.mubr.f32.gmra.mrb[0].mxu0 %v1372
        %v1374 = vpop.f32.mrb[0].mxu0
        %v1375 = vadd.f32 %v1210, %v1374
        %v1376 = vpop.f32.mrb[0].mxu0
        %1377 = vmatprep.mubr.f32.mxu0 0.0
        %v1378 = vand.u32 %v285, 4294901760
        %1379 = vmatmul.mubr.f32.gmra.mrb[0].mxu0 %v1378
        %v1380 = vpop.f32.mrb[0].mxu0
        %v1381 = vadd.f32 %v1216, %v1380
        %v1382 = vpop.f32.mrb[0].mxu0
        %1383 = vmatprep.mubr.f32.mxu0 0.0
        %v1384 = vand.u32 %v288, 4294901760
        %1385 = vmatmul.mubr.f32.gmra.mrb[0].mxu0 %v1384
        %v1386 = vpop.f32.mrb[0].mxu0
        %v1387 = vadd.f32 %v1222, %v1386
        %v1388 = vpop.f32.mrb[0].mxu0
        %1389 = vmatprep.mubr.f32.mxu0 0.0
        %v1390 = vand.u32 %v291, 4294901760
        %1391 = vmatmul.mubr.f32.gmra.mrb[0].mxu0 %v1390
        %v1392 = vpop.f32.mrb[0].mxu0
        %v1393 = vadd.f32 %v1228, %v1392
        %v1394 = vpop.f32.mrb[0].mxu0
        %1395 = vmatprep.mubr.f32.mxu0 0.0
        %v1396 = vand.u32 %v294, 4294901760
        %1397 = vmatmul.mubr.f32.gmra.mrb[0].mxu0 %v1396
        %v1398 = vpop.f32.mrb[0].mxu0
        %v1399 = vadd.f32 %v1234, %v1398
        %v1400 = vpop.f32.mrb[0].mxu0
        %1401 = vmatprep.mubr.f32.mxu0 0.0
        %v1402 = vand.u32 %v297, 4294901760
        %1403 = vmatmul.mubr.f32.gmra.mrb[0].mxu0 %v1402
        %v1404 = vpop.f32.mrb[0].mxu0
        %v1405 = vadd.f32 %v1240, %v1404
        %v1406 = vpop.f32.mrb[0].mxu0
        %1407 = vmatprep.mubr.f32.mxu0 0.0
        %v1408 = vand.u32 %v300, 4294901760
        %1409 = vmatmul.mubr.f32.gmra.mrb[0].mxu0 %v1408
        %v1410 = vpop.f32.mrb[0].mxu0
        %v1411 = vadd.f32 %v1246, %v1410
        %v1412 = vpop.f32.mrb[0].mxu0
        %1413 = vmatprep.mubr.f32.mxu0 0.0
        %v1414 = vand.u32 %v303, 4294901760
        %1415 = vmatmul.mubr.f32.gmra.mrb[0].mxu0 %v1414
        %v1416 = vpop.f32.mrb[0].mxu0
        %v1417 = vadd.f32 %v1252, %v1416
        %v1418 = vpop.f32.mrb[0].mxu0
        %1419 = vmatprep.mubr.f32.mxu0 0.0
        %v1420 = vand.u32 %v306, 4294901760
        %1421 = vmatmul.mubr.f32.gmra.mrb[0].mxu0 %v1420
        %v1422 = vpop.f32.mrb[0].mxu0
        %v1423 = vadd.f32 %v1258, %v1422
        %v1424 = vpop.f32.mrb[0].mxu0
        %1425 = vmatprep.mubr.f32.mxu0 0.0
        %v1426 = vand.u32 %v309, 4294901760
        %1427 = vmatmul.mubr.f32.gmra.mrb[0].mxu0 %v1426
        %v1428 = vpop.f32.mrb[0].mxu0
        %v1429 = vadd.f32 %v1264, %v1428
        %v1430 = vpop.f32.mrb[0].mxu0
        %1431 = vmatprep.mubr.f32.mxu0 0.0
        %v1432 = vand.u32 %v312, 4294901760
        %1433 = vmatmul.mubr.f32.gmra.mrb[0].mxu0 %v1432
        %v1434 = vpop.f32.mrb[0].mxu0
        %v1435 = vadd.f32 %v1270, %v1434
        %v1436 = vpop.f32.mrb[0].mxu0
        %1437 = vmatprep.mubr.f32.mxu0 0.0
        %v1438 = vand.u32 %v315, 4294901760
        %1439 = vmatmul.mubr.f32.gmra.mrb[0].mxu0 %v1438
        %v1440 = vpop.f32.mrb[0].mxu0
        %v1441 = vadd.f32 %v1276, %v1440
        %v1442 = vpop.f32.mrb[0].mxu0
        %1443 = vmatprep.mubr.f32.mxu0 0.0
        %v1444 = vand.u32 %v318, 4294901760
        %1445 = vmatmul.mubr.f32.gmra.mrb[0].mxu0 %v1444
        %v1446 = vpop.f32.mrb[0].mxu0
        %v1447 = vadd.f32 %v1282, %v1446
        %v1448 = vpop.f32.mrb[0].mxu0
        %1449 = vdwg.mxu0
        %1450 = vxpose.xlu0.b32.start [1/16] %v1357, 128
        %1451 = vxpose.xlu0.b32.cont [2/16] %v1363, 128
        %1452 = vxpose.xlu0.b32.cont [3/16] %v1369, 128
        %1453 = vxpose.xlu0.b32.cont [4/16] %v1375, 128
        %1454 = vxpose.xlu0.b32.cont [5/16] %v1381, 128
        %1455 = vxpose.xlu0.b32.cont [6/16] %v1387, 128
        %1456 = vxpose.xlu0.b32.cont [7/16] %v1393, 128
        %1457 = vxpose.xlu0.b32.cont [8/16] %v1399, 128
        %1458 = vxpose.xlu0.b32.cont [9/16] %v1405, 128
        %1459 = vxpose.xlu0.b32.cont [10/16] %v1411, 128
        %1460 = vxpose.xlu0.b32.cont [11/16] %v1417, 128
        %1461 = vxpose.xlu0.b32.cont [12/16] %v1423, 128
        %1462 = vxpose.xlu0.b32.cont [13/16] %v1429, 128
        %1463 = vxpose.xlu0.b32.cont [14/16] %v1435, 128
        %1464 = vxpose.xlu0.b32.cont [15/16] %v1441, 128
        %1465 = vxpose.xlu0.b32.end [16/16] %v1447, 128
        %v1466 = vpop.trf.xlu0
        %v1467 = vpop.trf.xlu0
        %v1468 = vpop.trf.xlu0
        %v1469 = vpop.trf.xlu0
        %v1470 = vpop.trf.xlu0
        %v1471 = vpop.trf.xlu0
        %v1472 = vpop.trf.xlu0
        %v1473 = vpop.trf.xlu0
        %v1474 = vpop.trf.xlu0
        %v1475 = vpop.trf.xlu0
        %v1476 = vpop.trf.xlu0
        %v1477 = vpop.trf.xlu0
        %v1478 = vpop.trf.xlu0
        %v1479 = vpop.trf.xlu0
        %v1480 = vpop.trf.xlu0
        %v1481 = vpop.trf.xlu0
        %s1482 = sld [smem:[#allocation2]]
        %v1483 = vstv %s1482
        %v1484 = vadd.f32 %v1466, %v1483
        %1485 = vst [vmem:[%s234] sm:$0x1] %v1484
        %s1486 = sld [smem:[#allocation2 + $0x1]]
        %v1487 = vstv %s1486
        %v1488 = vadd.f32 %v1466, %v1487
        %1489 = vst [vmem:[%s240 - $0x1] sm:$0x2] %v1488
        %s1490 = sand.u32 %s115, 1
        %s1491 = scalar_lea.sflag [#allocation3], %s1490
        %s1492 = sand.u32 %s115, 1
        %s1493 = scalar_lea.vmem [#allocation5], %s1492
        %s1494 = sand.u32 %s143, 1
        %s1495 = scalar_lea.sflag [#allocation7], %s1494
        %s1496 = sand.u32 %s143, 1
        %s1497 = scalar_lea.vmem [#allocation6], %s1496
        // Predicated region
        $region37: #{tpu_custom_call.1} parent=31 // pred_check
          %p1498 = pneg %p125
        $region38: #{tpu_custom_call.1} parent=31 // pred_check_branch
          %1500 = sbr.rel (%p1498) target = $region40
        $region39: #{tpu_custom_call.1} parent=31 // pred_region
          %s1502 = ssub.s32 16, 16
          %1503 = vsyncadd %s1491, %s1502
          %s1504 = sadd.s32 %s28, %s27
          %s1505 = smul.addr %s1504, 16
          %s1506 = scalar_lea.hbm %s3, %s1505
          %s1508 = sshll.u32 %s1493, 4
          %s1509 = int_to_ptr.vmem [resolvable:$true] %s1508
          %1511 = dma.vmem_to_hbm [thread:$0]  %s1509, 16, %s1506, %s1491
        $region40: #{tpu_custom_call.1} parent=31 // pred_fallthru
          _
        // Predicated region
        $region41: #{tpu_custom_call.1} parent=31 // pred_check
          %p1512 = pneg %p153
        $region42: #{tpu_custom_call.1} parent=31 // pred_check_branch
          %1514 = sbr.rel (%p1512) target = $region44
        $region43: #{tpu_custom_call.1} parent=31 // pred_region
          %s1516 = ssub.s32 16, 16
          %1517 = vsyncadd %s1495, %s1516
          %s1518 = sadd.s32 %s28, %s27
          %s1519 = smul.addr %s1518, 16
          %s1520 = scalar_lea.hbm %s4, %s1519
          %s1522 = sshll.u32 %s1497, 4
          %s1523 = int_to_ptr.vmem [resolvable:$true] %s1522
          %1525 = dma.vmem_to_hbm [thread:$0]  %s1523, 16, %s1520, %s1495
        $region44: #{tpu_custom_call.1} parent=31 // pred_fallthru
          _
      $region32: #{tpu_custom_call.1} parent=5 // pred_fallthru
        _
      %p1526 = scmp.le.s32.totalorder 2, %s18
      // Predicated region
      $region45: #{tpu_custom_call.1} parent=5 // pred_check
        %p1527 = pneg %p1526
      $region46: #{tpu_custom_call.1} parent=5 // pred_check_branch
        %1529 = sbr.rel (%p1527) target = $region48
      $region47: #{tpu_custom_call.1} parent=5 // pred_region
        %s1530 = ssub.s32 %s18, 2
        // Predicated region
        $region49: #{tpu_custom_call.1} parent=47 // pred_check
          %p1531 = pneg %p131
        $region50: #{tpu_custom_call.1} parent=47 // pred_check_branch
          %1533 = sbr.rel (%p1531) target = $region52
        $region51: #{tpu_custom_call.1} parent=47 // pred_region
          %s1534 = sand.u32 %s116, 1
          %s1535 = scalar_lea.sflag [#allocation3], %s1534
          %s1536 = sand.u32 %s116, 1
          %s1537 = scalar_lea.vmem [#allocation5], %s1536
          %1538 = dma.done %s1535, 16
        $region52: #{tpu_custom_call.1} parent=47 // pred_fallthru
          _
        // Predicated region
        $region53: #{tpu_custom_call.1} parent=47 // pred_check
          %p1539 = pneg %p159
        $region54: #{tpu_custom_call.1} parent=47 // pred_check_branch
          %1541 = sbr.rel (%p1539) target = $region56
        $region55: #{tpu_custom_call.1} parent=47 // pred_region
          %s1542 = sand.u32 %s144, 1
          %s1543 = scalar_lea.sflag [#allocation7], %s1542
          %s1544 = sand.u32 %s144, 1
          %s1545 = scalar_lea.vmem [#allocation6], %s1544
          %1546 = dma.done %s1543, 16
        $region56: #{tpu_custom_call.1} parent=47 // pred_fallthru
          _
      $region48: #{tpu_custom_call.1} parent=5 // pred_fallthru
        _
    $region6: #{tpu_custom_call.1} parent=1 // loop_footer
      %s22 = sadd.s32 1, %s18
    $region7: #{tpu_custom_call.1} parent=1 // loop_footer_branch
      %17 = sbr.rel target = $region3
    $region8: #{tpu_custom_call.1} parent=1 // loop_exit
      _
    %1547 = vsyncpa [#allocation3], 1
    %s1548 = scalar_lea.sflag [#allocation3], 1
    %1549 = vsyncpa %s1548, 1
    %1550 = vsyncpa [#allocation7], 1
    %s1551 = scalar_lea.sflag [#allocation7], 1
    %1552 = vsyncpa %s1551, 1
    %1553 = vsyncpa [#allocation4], 1
    %s1554 = scalar_lea.sflag [#allocation4], 1
    %1555 = vsyncpa %s1554, 1

</llo_original>
